<compile_context>
chip_gen: v7x
topology: tpu7x:2x2x1
jax: 0.10.0
libtpu: 0.0.40
codegen_flags: <defaults>
</compile_context>

<pallas_src>
import functools

import numpy as np
import jax
import jax.numpy as jnp
from jax.experimental import pallas as pl
from jax.experimental.pallas import tpu as pltpu


# ----------------------------- model constants ------------------------------
KH = 5                       # conv kernel size
C1_OUT = 6
C2_OUT = 16
H_IN = W_IN = 28             # input spatial size implied by fc_1 (16*5*5)
H_PAD = W_PAD = 32           # zero-padded plane for conv1 padding='same'
W1P = 14                     # width (and height) after pool1
W2P = 5                      # width (and height) after pool2
BLOCK_N = 8                  # images per grid step (raise to 64+ for big batches)

# TODO(synk): move the 2-pixel zero border of the input planes into the kernel
# to shave the last bit of wrapper glue / extra HBM input bytes.


# ------------------------------ fused kernel --------------------------------

def _lenet_kernel(xp_ref, m1_ref, b1_ref, m2_ref, b2_ref, wfc_ref, bfc_ref,
                  out_ref, h1_ref, h2_ref):
    f32, bf16 = jnp.float32, jnp.bfloat16
    nb = out_ref.shape[0]                      # images in this grid step

    # ---- conv1 (5x5, padding='same') + 2x2 avg-pool: one K=160 matmul ------
    # operand row q = concat_i (xp[2q+i] + xp[2q+i+1]); width-pool and the
    # 0.25 factor are folded into m1.  Pair sums come from stride-2 reads of
    # the padded input ref plus cheap rolls (jnp.roll -> static slices).
    r1 = 16 * nb
    ev = xp_ref[pl.ds(0, r1, stride=2), :]     # padded rows 2t      (r1, 32)
    od = xp_ref[pl.ds(1, r1, stride=2), :]     # padded rows 2t+1
    rs_e = ev + od                             # row-pair sum at even rows
    rs_o = od + jnp.roll(ev, -1, axis=0)       # row-pair sum at odd rows
    op1 = jnp.concatenate(
        [rs_e, rs_o,
         jnp.roll(rs_e, -1, axis=0), jnp.roll(rs_o, -1, axis=0),
         jnp.roll(rs_e, -2, axis=0)], axis=1).astype(bf16)       # (16nb, 160)
    p1 = jnp.dot(op1, m1_ref[...], preferred_element_type=f32)   # (16nb, 84)
    # 16 rows per image: rows 0..13 are the valid pooled rows, rows 14..15 are
    # finite junk (roll wrap-around) and are never read by later stages.
    h1_ref[...] = jnp.maximum(p1 + b1_ref[...], 0.0)             # f32 epilogue

    # ---- conv2 (5x5, valid) + 2x2 avg-pool: one K=420 matmul ---------------
    r2 = 8 * nb
    ev = h1_ref[pl.ds(0, r2, stride=2), :]     # h1 rows 2t          (r2, 84)
    od = h1_ref[pl.ds(1, r2, stride=2), :]     # h1 rows 2t+1
    rs_e = ev + od
    rs_o = od + jnp.roll(ev, -1, axis=0)
    op2 = jnp.concatenate(
        [rs_e, rs_o,
         jnp.roll(rs_e, -1, axis=0), jnp.roll(rs_o, -1, axis=0),
         jnp.roll(rs_e, -2, axis=0)], axis=1).astype(bf16)       # (8nb, 420)
    p2 = jnp.dot(op2, m2_ref[...], preferred_element_type=f32)   # (8nb, 80)
    # 8 rows per image: rows 0..4 valid, 5..7 finite junk (never read below).
    h2_ref[...] = jnp.maximum(p2 + b2_ref[...], 0.0)

    # ---- flatten + folded fc1@fc2@fc3: one K=400 matmul --------------------
    # Row b*8+q of h2 holds pooled row q of image b; gather the 5 valid rows
    # per image with stride-8 reads and lane-concat them into (nb, 400).
    flat = jnp.concatenate(
        [h2_ref[pl.ds(q, nb, stride=8), :] for q in range(W2P)],
        axis=1).astype(bf16)                                     # (nb, 400)
    out_ref[...] = (jnp.dot(flat, wfc_ref[...], preferred_element_type=f32)
                    + bfc_ref[...])


# ------------------------------ pallas wrapper -------------------------------

def _full_spec(shape):
    zeros = (0,) * len(shape)
    return pl.BlockSpec(shape, lambda g: zeros)


@functools.partial(jax.jit, static_argnames=("num_classes",))
def lenet_forward(x, packed, *, num_classes):
    """x: (N, 1, 28, 28) float32; packed: output of pack_params (batch-size
    independent, so any N works with the same packed weights)."""
    n = x.shape[0]
    assert x.shape[1:] == (1, H_IN, W_IN), x.shape
    npad = ((n + BLOCK_N - 1) // BLOCK_N) * BLOCK_N
    ncp = packed["wfc"].shape[1]               # lane-padded logits width

    # Pad batch up to the tile size and each plane with the 2-pixel zero
    # border needed by conv1's padding='same'; stack planes along rows.
    xp = jnp.pad(x.reshape(n, H_IN, W_IN).astype(jnp.float32),
                 ((0, npad - n), (2, 2), (2, 2)))
    xp = xp.reshape(npad * H_PAD, W_PAD)

    operands = (xp, packed["m1"], packed["b1"], packed["m2"], packed["b2"],
                packed["wfc"], packed["bfc"])
    in_specs = [pl.BlockSpec((BLOCK_N * H_PAD, W_PAD), lambda g: (g, 0))]
    in_specs += [_full_spec(op.shape) for op in operands[1:]]

    out = pl.pallas_call(
        _lenet_kernel,
        out_shape=jax.ShapeDtypeStruct((npad, ncp), jnp.float32),
        grid_spec=pltpu.PrefetchScalarGridSpec(
            num_scalar_prefetch=0,
            grid=(npad // BLOCK_N,),
            in_specs=in_specs,
            out_specs=pl.BlockSpec((BLOCK_N, ncp), lambda g: (g, 0)),
            scratch_shapes=[
                pltpu.VMEM((BLOCK_N * 16, C1_OUT * W1P), jnp.float32),  # h1
                pltpu.VMEM((BLOCK_N * 8, C2_OUT * W2P), jnp.float32),   # h2
            ]),
        compiler_params=pltpu.CompilerParams(
            dimension_semantics=("parallel",),
            vmem_limit_bytes=32 * 1024 * 1024),
    )(*operands)
    return out[:n, :num_classes]


# ------------------------- params + one-time packing -------------------------

def init_params(key, num_classes):
    ks = jax.random.split(key, 10)

    def w(k, shape, fan_in):
        return jax.random.normal(k, shape, jnp.float32) / np.sqrt(fan_in)

    return {
        "conv1_w": w(ks[0], (C1_OUT, 1, KH, KH), 1 * KH * KH),
        "conv1_b": w(ks[1], (C1_OUT,), 1 * KH * KH),
        "conv2_w": w(ks[2], (C2_OUT, C1_OUT, KH, KH), C1_OUT * KH * KH),
        "conv2_b": w(ks[3], (C2_OUT,), C1_OUT * KH * KH),
        "fc1_w": w(ks[4], (120, 400), 400),
        "fc1_b": w(ks[5], (120,), 400),
        "fc2_w": w(ks[6], (84, 120), 120),
        "fc2_b": w(ks[7], (84,), 120),
        "fc3_w": w(ks[8], (num_classes, 84), 84),
        "fc3_b": w(ks[9], (num_classes,), 84),
    }


def pack_params(params):
    """One-time, batch-size-independent weight repacking:
       * conv weights get the im2col structure, the 2x2 avg-pool width
         reduction and the 0.25 pool factor folded in (bf16 for the MXU),
       * conv biases are expanded per output column (f32),
       * fc1/fc2/fc3 are folded into one (400, num_classes) matrix (the
         reference has no activation between them), reordered for the kernel's
         flatten layout and lane-padded to a multiple of 128."""
    f64 = np.float64
    w1 = np.asarray(params["conv1_w"], f64)
    b1 = np.asarray(params["conv1_b"], f64)
    w2 = np.asarray(params["conv2_w"], f64)
    b2 = np.asarray(params["conv2_b"], f64)

    # conv1+pool1 weight: multiplies op1[q, i*32+u] = xp[2q+i, u] + xp[2q+i+1, u]
    m1 = np.zeros((KH * W_PAD, C1_OUT * W1P), f64)
    for c in range(C1_OUT):
        for i in range(KH):
            for j in range(KH):
                wv = 0.25 * w1[c, 0, i, j]
                for p in range(W1P):
                    m1[i * W_PAD + 2 * p + j, c * W1P + p] += wv
                    m1[i * W_PAD + 2 * p + j + 1, c * W1P + p] += wv
    b1_row = np.repeat(b1, W1P).reshape(1, C1_OUT * W1P)

    # conv2+pool2 weight: multiplies op2[q, i*84+ci*14+u] = h1[2q+i, ci*14+u]
    #                                                      + h1[2q+i+1, ci*14+u]
    m2 = np.zeros((KH * C1_OUT * W1P, C2_OUT * W2P), f64)
    for co in range(C2_OUT):
        for ci in range(C1_OUT):
            for i in range(KH):
                for j in range(KH):
                    wv = 0.25 * w2[co, ci, i, j]
                    for p in range(W2P):
                        u = 2 * p + j
                        m2[i * (C1_OUT * W1P) + ci * W1P + u, co * W2P + p] += wv
                        m2[i * (C1_OUT * W1P) + ci * W1P + u + 1, co * W2P + p] += wv
    b2_row = np.repeat(b2, W2P).reshape(1, C2_OUT * W2P)

    # fc1 -> fc2 -> fc3 fold (bias-only stack; no activations between them).
    fc1_w = np.asarray(params["fc1_w"], f64); fc1_b = np.asarray(params["fc1_b"], f64)
    fc2_w = np.asarray(params["fc2_w"], f64); fc2_b = np.asarray(params["fc2_b"], f64)
    fc3_w = np.asarray(params["fc3_w"], f64); fc3_b = np.asarray(params["fc3_b"], f64)
    wfold = fc1_w.T @ fc2_w.T @ fc3_w.T                      # (400, nc)
    bfold = (fc1_b @ fc2_w.T + fc2_b) @ fc3_w.T + fc3_b      # (nc,)
    nc = wfold.shape[1]
    ncp = ((nc + 127) // 128) * 128                          # lane-dense logits
    # kernel flatten order is q*80 + co*5 + p; torch order is co*25 + q*5 + p
    wfc = np.zeros((W2P * C2_OUT * W2P, ncp), f64)
    for q in range(W2P):
        for co in range(C2_OUT):
            for p in range(W2P):
                wfc[q * (C2_OUT * W2P) + co * W2P + p, :nc] = \
                    wfold[co * 25 + q * 5 + p, :]
    bfc = np.zeros((1, ncp), f64)
    bfc[0, :nc] = bfold

    return {
        "m1": jnp.asarray(m1, jnp.bfloat16),
        "b1": jnp.asarray(b1_row, jnp.float32),
        "m2": jnp.asarray(m2, jnp.bfloat16),
        "b2": jnp.asarray(b2_row, jnp.float32),
        "wfc": jnp.asarray(wfc, jnp.bfloat16),
        "bfc": jnp.asarray(bfc, jnp.float32),
    }


# ------------------------- pure-JAX reference check --------------------------

def _avgpool2(y):
    n, c, h, w = y.shape
    return y.reshape(n, c, h // 2, 2, w // 2, 2).mean(axis=(3, 5))


def lenet_reference(x, params):
    dn = ("NCHW", "OIHW", "NCHW")
    hi = jax.lax.Precision.HIGHEST
    y = jax.lax.conv_general_dilated(x, params["conv1_w"], (1, 1), "SAME",
                                     dimension_numbers=dn, precision=hi)
    y = y + params["conv1_b"].reshape(1, -1, 1, 1)
    y = jax.nn.relu(_avgpool2(y))
    y = jax.lax.conv_general_dilated(y, params["conv2_w"], (1, 1), "VALID",
                                     dimension_numbers=dn, precision=hi)
    y = y + params["conv2_b"].reshape(1, -1, 1, 1)
    y = jax.nn.relu(_avgpool2(y))
    y = y.reshape(y.shape[0], -1)
    y = jnp.dot(y, params["fc1_w"].T, precision=hi) + params["fc1_b"]
    y = jnp.dot(y, params["fc2_w"].T, precision=hi) + params["fc2_b"]
    y = jnp.dot(y, params["fc3_w"].T, precision=hi) + params["fc3_b"]
    return y


# ----------------------------------- main ------------------------------------

if __name__ == "__main__":
    num_classes = 10
    batch = 2
    key = jax.random.PRNGKey(0)
    k_x, k_p = jax.random.split(key)
    # fc_1 expects 16*5*5 features => single-channel 28x28 input.
    x = jax.random.normal(k_x, (batch, 1, H_IN, W_IN), jnp.float32)
    params = init_params(k_p, num_classes)
    packed = pack_params(params)            # one-time, batch-independent

    out = jax.block_until_ready(
        lenet_forward(x, packed, num_classes=num_classes))
    assert out.shape == (batch, num_classes), out.shape

    ref = jax.block_until_ready(lenet_reference(x, params))
    np.testing.assert_allclose(np.asarray(out), np.asarray(ref),
                               rtol=5e-2, atol=5e-2)
    print("KERNEL_OK")
</pallas_src>

<mosaic_0001>
module attributes {stable_mosaic.version = 11 : i64} {
  func.func @_lenet_kernel(%arg0: i32, %arg1: memref<256x32xf32, #tpu.memory_space<vmem>>, %arg2: memref<160x84xbf16, #tpu.memory_space<vmem>>, %arg3: memref<1x84xf32, #tpu.memory_space<vmem>>, %arg4: memref<420x80xbf16, #tpu.memory_space<vmem>>, %arg5: memref<1x80xf32, #tpu.memory_space<vmem>>, %arg6: memref<400x128xbf16, #tpu.memory_space<vmem>>, %arg7: memref<1x128xf32, #tpu.memory_space<vmem>>, %arg8: memref<8x128xf32, #tpu.memory_space<vmem>>, %arg9: memref<128x84xf32, #tpu.memory_space<vmem>>, %arg10: memref<64x80xf32, #tpu.memory_space<vmem>>) attributes {dimension_semantics = [#tpu.dimension_semantics<parallel>], iteration_bounds = array<i64: 1>, scalar_prefetch = 0 : i64, scratch_operands = 2 : i64, tpu.core_type = #tpu.core_type<tc>, window_params = [{transform_indices = @transform_0, window_bounds = array<i64: 256, 32>}, {pipeline_mode = #tpu.pipeline_mode<synchronous>, transform_indices = @transform_1, window_bounds = array<i64: 160, 84>}, {pipeline_mode = #tpu.pipeline_mode<synchronous>, transform_indices = @transform_2, window_bounds = array<i64: 1, 84>}, {pipeline_mode = #tpu.pipeline_mode<synchronous>, transform_indices = @transform_3, window_bounds = array<i64: 420, 80>}, {pipeline_mode = #tpu.pipeline_mode<synchronous>, transform_indices = @transform_4, window_bounds = array<i64: 1, 80>}, {pipeline_mode = #tpu.pipeline_mode<synchronous>, transform_indices = @transform_5, window_bounds = array<i64: 400, 128>}, {pipeline_mode = #tpu.pipeline_mode<synchronous>, transform_indices = @transform_6, window_bounds = array<i64: 1, 128>}, {transform_indices = @transform_7, window_bounds = array<i64: 8, 128>}]} {
    %c0 = arith.constant 0 : index
    %c0_0 = arith.constant 0 : index
    %0 = tpu.strided_load %arg1[%c0, %c0_0] {strides = array<i32: 2, 1>} : memref<256x32xf32, #tpu.memory_space<vmem>>, vector<128x32xf32>
    %c1 = arith.constant 1 : index
    %c0_1 = arith.constant 0 : index
    %1 = tpu.strided_load %arg1[%c1, %c0_1] {strides = array<i32: 2, 1>} : memref<256x32xf32, #tpu.memory_space<vmem>>, vector<128x32xf32>
    %2 = arith.addf %0, %1 : vector<128x32xf32>
    %3 = vector.extract_strided_slice %0 {offsets = [1, 0], sizes = [127, 32], strides = [1, 1]} : vector<128x32xf32> to vector<127x32xf32>
    %4 = vector.extract_strided_slice %0 {offsets = [0, 0], sizes = [1, 32], strides = [1, 1]} : vector<128x32xf32> to vector<1x32xf32>
    %5 = tpu.concatenate %3, %4 in 0 : vector<127x32xf32>, vector<1x32xf32> -> vector<128x32xf32>
    %6 = arith.addf %1, %5 : vector<128x32xf32>
    %7 = vector.extract_strided_slice %2 {offsets = [1, 0], sizes = [127, 32], strides = [1, 1]} : vector<128x32xf32> to vector<127x32xf32>
    %8 = vector.extract_strided_slice %2 {offsets = [0, 0], sizes = [1, 32], strides = [1, 1]} : vector<128x32xf32> to vector<1x32xf32>
    %9 = tpu.concatenate %7, %8 in 0 : vector<127x32xf32>, vector<1x32xf32> -> vector<128x32xf32>
    %10 = vector.extract_strided_slice %6 {offsets = [1, 0], sizes = [127, 32], strides = [1, 1]} : vector<128x32xf32> to vector<127x32xf32>
    %11 = vector.extract_strided_slice %6 {offsets = [0, 0], sizes = [1, 32], strides = [1, 1]} : vector<128x32xf32> to vector<1x32xf32>
    %12 = tpu.concatenate %10, %11 in 0 : vector<127x32xf32>, vector<1x32xf32> -> vector<128x32xf32>
    %13 = vector.extract_strided_slice %2 {offsets = [2, 0], sizes = [126, 32], strides = [1, 1]} : vector<128x32xf32> to vector<126x32xf32>
    %14 = vector.extract_strided_slice %2 {offsets = [0, 0], sizes = [2, 32], strides = [1, 1]} : vector<128x32xf32> to vector<2x32xf32>
    %15 = tpu.concatenate %13, %14 in 0 : vector<126x32xf32>, vector<2x32xf32> -> vector<128x32xf32>
    %16 = tpu.concatenate %2, %6, %9, %12, %15 in 1 : vector<128x32xf32>, vector<128x32xf32>, vector<128x32xf32>, vector<128x32xf32>, vector<128x32xf32> -> vector<128x160xf32>
    %17 = arith.truncf %16 : vector<128x160xf32> to vector<128x160xbf16>
    %c0_2 = arith.constant 0 : index
    %c0_3 = arith.constant 0 : index
    %18 = vector.load %arg2[%c0_2, %c0_3] : memref<160x84xbf16, #tpu.memory_space<vmem>>, vector<160x84xbf16>
    %cst = arith.constant dense<0.000000e+00> : vector<128x84xf32>
    %19 = tpu.matmul %17, %18, %cst {dimension_numbers = #tpu.dot_dimension_numbers<[1], [0], [0], [1], [0, 0, 1, 1], [], []>} : vector<128x160xbf16>, vector<160x84xbf16>, vector<128x84xf32> -> vector<128x84xf32>
    %c0_4 = arith.constant 0 : index
    %c0_5 = arith.constant 0 : index
    %20 = vector.load %arg3[%c0_4, %c0_5] : memref<1x84xf32, #tpu.memory_space<vmem>>, vector<1x84xf32>
    %21 = vector.broadcast %20 : vector<1x84xf32> to vector<128x84xf32>
    %22 = arith.addf %19, %21 : vector<128x84xf32>
    %cst_6 = arith.constant 0.000000e+00 : f32
    %23 = vector.broadcast %cst_6 : f32 to vector<128x84xf32>
    %24 = arith.maximumf %22, %23 : vector<128x84xf32>
    %c0_7 = arith.constant 0 : index
    %c0_8 = arith.constant 0 : index
    %25 = vector.load %arg9[%c0_7, %c0_8] : memref<128x84xf32, #tpu.memory_space<vmem>>, vector<128x84xf32>
    tpu.vector_store %arg9[%c0_7, %c0_8], %24 {strides = array<i32>} : memref<128x84xf32, #tpu.memory_space<vmem>>, vector<128x84xf32>,
    %c0_9 = arith.constant 0 : index
    %c0_10 = arith.constant 0 : index
    %26 = tpu.strided_load %arg9[%c0_9, %c0_10] {strides = array<i32: 2, 1>} : memref<128x84xf32, #tpu.memory_space<vmem>>, vector<64x84xf32>
    %c1_11 = arith.constant 1 : index
    %c0_12 = arith.constant 0 : index
    %27 = tpu.strided_load %arg9[%c1_11, %c0_12] {strides = array<i32: 2, 1>} : memref<128x84xf32, #tpu.memory_space<vmem>>, vector<64x84xf32>
    %28 = arith.addf %26, %27 : vector<64x84xf32>
    %29 = vector.extract_strided_slice %26 {offsets = [1, 0], sizes = [63, 84], strides = [1, 1]} : vector<64x84xf32> to vector<63x84xf32>
    %30 = vector.extract_strided_slice %26 {offsets = [0, 0], sizes = [1, 84], strides = [1, 1]} : vector<64x84xf32> to vector<1x84xf32>
    %31 = tpu.concatenate %29, %30 in 0 : vector<63x84xf32>, vector<1x84xf32> -> vector<64x84xf32>
    %32 = arith.addf %27, %31 : vector<64x84xf32>
    %33 = vector.extract_strided_slice %28 {offsets = [1, 0], sizes = [63, 84], strides = [1, 1]} : vector<64x84xf32> to vector<63x84xf32>
    %34 = vector.extract_strided_slice %28 {offsets = [0, 0], sizes = [1, 84], strides = [1, 1]} : vector<64x84xf32> to vector<1x84xf32>
    %35 = tpu.concatenate %33, %34 in 0 : vector<63x84xf32>, vector<1x84xf32> -> vector<64x84xf32>
    %36 = vector.extract_strided_slice %32 {offsets = [1, 0], sizes = [63, 84], strides = [1, 1]} : vector<64x84xf32> to vector<63x84xf32>
    %37 = vector.extract_strided_slice %32 {offsets = [0, 0], sizes = [1, 84], strides = [1, 1]} : vector<64x84xf32> to vector<1x84xf32>
    %38 = tpu.concatenate %36, %37 in 0 : vector<63x84xf32>, vector<1x84xf32> -> vector<64x84xf32>
    %39 = vector.extract_strided_slice %28 {offsets = [2, 0], sizes = [62, 84], strides = [1, 1]} : vector<64x84xf32> to vector<62x84xf32>
    %40 = vector.extract_strided_slice %28 {offsets = [0, 0], sizes = [2, 84], strides = [1, 1]} : vector<64x84xf32> to vector<2x84xf32>
    %41 = tpu.concatenate %39, %40 in 0 : vector<62x84xf32>, vector<2x84xf32> -> vector<64x84xf32>
    %42 = tpu.concatenate %28, %32, %35, %38, %41 in 1 : vector<64x84xf32>, vector<64x84xf32>, vector<64x84xf32>, vector<64x84xf32>, vector<64x84xf32> -> vector<64x420xf32>
    %43 = arith.truncf %42 : vector<64x420xf32> to vector<64x420xbf16>
    %c0_13 = arith.constant 0 : index
    %c0_14 = arith.constant 0 : index
    %44 = vector.load %arg4[%c0_13, %c0_14] : memref<420x80xbf16, #tpu.memory_space<vmem>>, vector<420x80xbf16>
    %cst_15 = arith.constant dense<0.000000e+00> : vector<64x80xf32>
    %45 = tpu.matmul %43, %44, %cst_15 {dimension_numbers = #tpu.dot_dimension_numbers<[1], [0], [0], [1], [0, 0, 1, 1], [], []>} : vector<64x420xbf16>, vector<420x80xbf16>, vector<64x80xf32> -> vector<64x80xf32>
    %c0_16 = arith.constant 0 : index
    %c0_17 = arith.constant 0 : index
    %46 = vector.load %arg5[%c0_16, %c0_17] : memref<1x80xf32, #tpu.memory_space<vmem>>, vector<1x80xf32>
    %47 = vector.broadcast %46 : vector<1x80xf32> to vector<64x80xf32>
    %48 = arith.addf %45, %47 : vector<64x80xf32>
    %cst_18 = arith.constant 0.000000e+00 : f32
    %49 = vector.broadcast %cst_18 : f32 to vector<64x80xf32>
    %50 = arith.maximumf %48, %49 : vector<64x80xf32>
    %c0_19 = arith.constant 0 : index
    %c0_20 = arith.constant 0 : index
    %51 = vector.load %arg10[%c0_19, %c0_20] : memref<64x80xf32, #tpu.memory_space<vmem>>, vector<64x80xf32>
    tpu.vector_store %arg10[%c0_19, %c0_20], %50 {strides = array<i32>} : memref<64x80xf32, #tpu.memory_space<vmem>>, vector<64x80xf32>,
    %c0_21 = arith.constant 0 : index
    %c0_22 = arith.constant 0 : index
    %52 = tpu.strided_load %arg10[%c0_21, %c0_22] {strides = array<i32: 8, 1>} : memref<64x80xf32, #tpu.memory_space<vmem>>, vector<8x80xf32>
    %c1_23 = arith.constant 1 : index
    %c0_24 = arith.constant 0 : index
    %53 = tpu.strided_load %arg10[%c1_23, %c0_24] {strides = array<i32: 8, 1>} : memref<64x80xf32, #tpu.memory_space<vmem>>, vector<8x80xf32>
    %c2 = arith.constant 2 : index
    %c0_25 = arith.constant 0 : index
    %54 = tpu.strided_load %arg10[%c2, %c0_25] {strides = array<i32: 8, 1>} : memref<64x80xf32, #tpu.memory_space<vmem>>, vector<8x80xf32>
    %c3 = arith.constant 3 : index
    %c0_26 = arith.constant 0 : index
    %55 = tpu.strided_load %arg10[%c3, %c0_26] {strides = array<i32: 8, 1>} : memref<64x80xf32, #tpu.memory_space<vmem>>, vector<8x80xf32>
    %c4 = arith.constant 4 : index
    %c0_27 = arith.constant 0 : index
    %56 = tpu.strided_load %arg10[%c4, %c0_27] {strides = array<i32: 8, 1>} : memref<64x80xf32, #tpu.memory_space<vmem>>, vector<8x80xf32>
    %57 = tpu.concatenate %52, %53, %54, %55, %56 in 1 : vector<8x80xf32>, vector<8x80xf32>, vector<8x80xf32>, vector<8x80xf32>, vector<8x80xf32> -> vector<8x400xf32>
    %58 = arith.truncf %57 : vector<8x400xf32> to vector<8x400xbf16>
    %c0_28 = arith.constant 0 : index
    %c0_29 = arith.constant 0 : index
    %59 = vector.load %arg6[%c0_28, %c0_29] : memref<400x128xbf16, #tpu.memory_space<vmem>>, vector<400x128xbf16>
    %cst_30 = arith.constant dense<0.000000e+00> : vector<8x128xf32>
    %60 = tpu.matmul %58, %59, %cst_30 {dimension_numbers = #tpu.dot_dimension_numbers<[1], [0], [0], [1], [0, 0, 1, 1], [], []>} : vector<8x400xbf16>, vector<400x128xbf16>, vector<8x128xf32> -> vector<8x128xf32>
    %c0_31 = arith.constant 0 : index
    %c0_32 = arith.constant 0 : index
    %61 = vector.load %arg7[%c0_31, %c0_32] : memref<1x128xf32, #tpu.memory_space<vmem>>, vector<1x128xf32>
    %62 = vector.broadcast %61 : vector<1x128xf32> to vector<8x128xf32>
    %63 = arith.addf %60, %62 : vector<8x128xf32>
    %c0_33 = arith.constant 0 : index
    %c0_34 = arith.constant 0 : index
    %64 = vector.load %arg8[%c0_33, %c0_34] : memref<8x128xf32, #tpu.memory_space<vmem>>, vector<8x128xf32>
    tpu.vector_store %arg8[%c0_33, %c0_34], %63 {strides = array<i32>} : memref<8x128xf32, #tpu.memory_space<vmem>>, vector<8x128xf32>,
    return
  }
  func.func @transform_0(%arg0: i32) -> (i32, i32) {
    %c0_i32 = arith.constant 0 : i32
    %c0_i32_0 = arith.constant 0 : i32
    return %arg0, %c0_i32 : i32, i32
  }
  func.func @transform_1(%arg0: i32) -> (i32, i32) {
    %c0_i32 = arith.constant 0 : i32
    %c0_i32_0 = arith.constant 0 : i32
    %c0_i32_1 = arith.constant 0 : i32
    return %c0_i32, %c0_i32_0 : i32, i32
  }
  func.func @transform_2(%arg0: i32) -> (i32, i32) {
    %c0_i32 = arith.constant 0 : i32
    %c0_i32_0 = arith.constant 0 : i32
    %c0_i32_1 = arith.constant 0 : i32
    return %c0_i32, %c0_i32_0 : i32, i32
  }
  func.func @transform_3(%arg0: i32) -> (i32, i32) {
    %c0_i32 = arith.constant 0 : i32
    %c0_i32_0 = arith.constant 0 : i32
    %c0_i32_1 = arith.constant 0 : i32
    return %c0_i32, %c0_i32_0 : i32, i32
  }
  func.func @transform_4(%arg0: i32) -> (i32, i32) {
    %c0_i32 = arith.constant 0 : i32
    %c0_i32_0 = arith.constant 0 : i32
    %c0_i32_1 = arith.constant 0 : i32
    return %c0_i32, %c0_i32_0 : i32, i32
  }
  func.func @transform_5(%arg0: i32) -> (i32, i32) {
    %c0_i32 = arith.constant 0 : i32
    %c0_i32_0 = arith.constant 0 : i32
    %c0_i32_1 = arith.constant 0 : i32
    return %c0_i32, %c0_i32_0 : i32, i32
  }
  func.func @transform_6(%arg0: i32) -> (i32, i32) {
    %c0_i32 = arith.constant 0 : i32
    %c0_i32_0 = arith.constant 0 : i32
    %c0_i32_1 = arith.constant 0 : i32
    return %c0_i32, %c0_i32_0 : i32, i32
  }
  func.func @transform_7(%arg0: i32) -> (i32, i32) {
    %c0_i32 = arith.constant 0 : i32
    %c0_i32_0 = arith.constant 0 : i32
    return %arg0, %c0_i32 : i32, i32
  }
}

</mosaic_0001>

<llo_original>
// kernel: lenet_forward.1
$region0: #{lenet_forward.1}
  #allocation0 [shape = 'u32[]', space=smem, size = 0x4, offset = 0x4, fixed_abs, tag = 'smem constant byte address 0x4 - core index']
  #allocation1 [shape = 'u32[144,128]{1,0:T(1,128)}', space=vmem, size = 0x12000, scoped, tag = 'internal scratch']
  #allocation2 [shape = 'f32[128,84]{1,0:T(8,128)}', space=vmem, size = 0x10000, scoped, tag = 'scratch operand']
  #allocation3 [shape = 'f32[64,80]{1,0:T(8,128)}', space=vmem, size = 0x8000, scoped, tag = 'scratch operand']
  %s0 = inlined_call_operand.vmem [shape: f32[256,32], index: 0, kind: input, shape index: {}]
  %s1 = inlined_call_operand.vmem [shape: bf16[160,84], index: 1, kind: input, shape index: {}]
  %s2 = inlined_call_operand.vmem [shape: f32[1,84], index: 2, kind: input, shape index: {}]
  %s3 = inlined_call_operand.vmem [shape: bf16[420,80], index: 3, kind: input, shape index: {}]
  %s4 = inlined_call_operand.vmem [shape: f32[1,80], index: 4, kind: input, shape index: {}]
  %s5 = inlined_call_operand.vmem [shape: bf16[400,128], index: 5, kind: input, shape index: {}]
  %s6 = inlined_call_operand.vmem [shape: f32[1,128], index: 6, kind: input, shape index: {}]
  %s7 = inlined_call_operand.vmem [shape: f32[8,128], index: 7, kind: output, shape index: {}]
  %s8 = sld [smem:[#allocation0]]
  $region38: #{lenet_forward.1} parent=0
    _
  %s10 = ssub.s32 1, %s8
  %s11 = scalar_select 0, %s10, %s8
  // Predicated region
  $region2: #{lenet_forward.1} parent=0 // pred_check
    _
  $region3: #{lenet_forward.1} parent=0 // pred_check_branch
    %13 = sbr.rel (0) target = $region5
  $region4: #{lenet_forward.1} parent=0 // pred_region
    _
  $region5: #{lenet_forward.1} parent=0 // pred_fallthru
    _
  // Predicated region
  $region6: #{lenet_forward.1} parent=0 // pred_check
    _
  $region7: #{lenet_forward.1} parent=0 // pred_check_branch
    %15 = sbr.rel (0) target = $region9
  $region8: #{lenet_forward.1} parent=0 // pred_region
    _
  $region9: #{lenet_forward.1} parent=0 // pred_fallthru
    _
  // Predicated region
  $region10: #{lenet_forward.1} parent=0 // pred_check
    _
  $region11: #{lenet_forward.1} parent=0 // pred_check_branch
    %17 = sbr.rel (0) target = $region13
  $region12: #{lenet_forward.1} parent=0 // pred_region
    _
  $region13: #{lenet_forward.1} parent=0 // pred_fallthru
    _
  // Predicated region
  $region14: #{lenet_forward.1} parent=0 // pred_check
    _
  $region15: #{lenet_forward.1} parent=0 // pred_check_branch
    %19 = sbr.rel (0) target = $region17
  $region16: #{lenet_forward.1} parent=0 // pred_region
    _
  $region17: #{lenet_forward.1} parent=0 // pred_fallthru
    _
  // Predicated region
  $region18: #{lenet_forward.1} parent=0 // pred_check
    _
  $region19: #{lenet_forward.1} parent=0 // pred_check_branch
    %21 = sbr.rel (0) target = $region21
  $region20: #{lenet_forward.1} parent=0 // pred_region
    _
  $region21: #{lenet_forward.1} parent=0 // pred_fallthru
    _
  // Predicated region
  $region22: #{lenet_forward.1} parent=0 // pred_check
    _
  $region23: #{lenet_forward.1} parent=0 // pred_check_branch
    %23 = sbr.rel (0) target = $region25
  $region24: #{lenet_forward.1} parent=0 // pred_region
    _
  $region25: #{lenet_forward.1} parent=0 // pred_fallthru
    _
  // Predicated region
  $region26: #{lenet_forward.1} parent=0 // pred_check
    _
  $region27: #{lenet_forward.1} parent=0 // pred_check_branch
    %25 = sbr.rel (0) target = $region29
  $region28: #{lenet_forward.1} parent=0 // pred_region
    _
  $region29: #{lenet_forward.1} parent=0 // pred_fallthru
    _
  %v27 = vld [vmem:[%s0] ss:$2 sm:$0xff]
  %s28 = scalar_lea.vmem %s0, 16
  %v29 = vld [vmem:[%s28] ss:$2 sm:$0xff]
  %s30 = scalar_lea.vmem %s0, 32
  %v31 = vld [vmem:[%s30] ss:$2 sm:$0xff]
  %s32 = scalar_lea.vmem %s0, 48
  %v33 = vld [vmem:[%s32] ss:$2 sm:$0xff]
  %s34 = scalar_lea.vmem %s0, 64
  %v35 = vld [vmem:[%s34] ss:$2 sm:$0xff]
  %s36 = scalar_lea.vmem %s0, 80
  %v37 = vld [vmem:[%s36] ss:$2 sm:$0xff]
  %s38 = scalar_lea.vmem %s0, 96
  %v39 = vld [vmem:[%s38] ss:$2 sm:$0xff]
  %s40 = scalar_lea.vmem %s0, 112
  %v41 = vld [vmem:[%s40] ss:$2 sm:$0xff]
  %s42 = scalar_lea.vmem %s0, 128
  %v43 = vld [vmem:[%s42] ss:$2 sm:$0xff]
  %s44 = scalar_lea.vmem %s0, 144
  %v45 = vld [vmem:[%s44] ss:$2 sm:$0xff]
  %s46 = scalar_lea.vmem %s0, 160
  %v47 = vld [vmem:[%s46] ss:$2 sm:$0xff]
  %s48 = scalar_lea.vmem %s0, 176
  %v49 = vld [vmem:[%s48] ss:$2 sm:$0xff]
  %s50 = scalar_lea.vmem %s0, 192
  %v51 = vld [vmem:[%s50] ss:$2 sm:$0xff]
  %s52 = scalar_lea.vmem %s0, 208
  %v53 = vld [vmem:[%s52] ss:$2 sm:$0xff]
  %s54 = scalar_lea.vmem %s0, 224
  %v55 = vld [vmem:[%s54] ss:$2 sm:$0xff]
  %s56 = scalar_lea.vmem %s0, 240
  %v57 = vld [vmem:[%s56] ss:$2 sm:$0xff]
  %s58 = scalar_lea.vmem %s0, 1
  %v59 = vld [vmem:[%s58] ss:$2 sm:$0xff]
  %s60 = scalar_lea.vmem %s0, 17
  %v61 = vld [vmem:[%s60] ss:$2 sm:$0xff]
  %s62 = scalar_lea.vmem %s0, 33
  %v63 = vld [vmem:[%s62] ss:$2 sm:$0xff]
  %s64 = scalar_lea.vmem %s0, 49
  %v65 = vld [vmem:[%s64] ss:$2 sm:$0xff]
  %s66 = scalar_lea.vmem %s0, 65
  %v67 = vld [vmem:[%s66] ss:$2 sm:$0xff]
  %s68 = scalar_lea.vmem %s0, 81
  %v69 = vld [vmem:[%s68] ss:$2 sm:$0xff]
  %s70 = scalar_lea.vmem %s0, 97
  %v71 = vld [vmem:[%s70] ss:$2 sm:$0xff]
  %s72 = scalar_lea.vmem %s0, 113
  %v73 = vld [vmem:[%s72] ss:$2 sm:$0xff]
  %s74 = scalar_lea.vmem %s0, 129
  %v75 = vld [vmem:[%s74] ss:$2 sm:$0xff]
  %s76 = scalar_lea.vmem %s0, 145
  %v77 = vld [vmem:[%s76] ss:$2 sm:$0xff]
  %s78 = scalar_lea.vmem %s0, 161
  %v79 = vld [vmem:[%s78] ss:$2 sm:$0xff]
  %s80 = scalar_lea.vmem %s0, 177
  %v81 = vld [vmem:[%s80] ss:$2 sm:$0xff]
  %s82 = scalar_lea.vmem %s0, 193
  %v83 = vld [vmem:[%s82] ss:$2 sm:$0xff]
  %s84 = scalar_lea.vmem %s0, 209
  %v85 = vld [vmem:[%s84] ss:$2 sm:$0xff]
  %s86 = scalar_lea.vmem %s0, 225
  %v87 = vld [vmem:[%s86] ss:$2 sm:$0xff]
  %s88 = scalar_lea.vmem %s0, 241
  %v89 = vld [vmem:[%s88] ss:$2 sm:$0xff]
  %v90 = vadd.f32 %v27, %v59
  %v91 = vadd.f32 %v29, %v61
  %v92 = vadd.f32 %v31, %v63
  %v93 = vadd.f32 %v33, %v65
  %v94 = vadd.f32 %v35, %v67
  %v95 = vadd.f32 %v37, %v69
  %v96 = vadd.f32 %v39, %v71
  %v97 = vadd.f32 %v41, %v73
  %v98 = vadd.f32 %v43, %v75
  %v99 = vadd.f32 %v45, %v77
  %v100 = vadd.f32 %v47, %v79
  %v101 = vadd.f32 %v49, %v81
  %v102 = vadd.f32 %v51, %v83
  %v103 = vadd.f32 %v53, %v85
  %v104 = vadd.f32 %v55, %v87
  %v105 = vadd.f32 %v57, %v89
  %vm122 = vcmask 1046528
  %v123 = vrot.slane %v27, 1
  %v124 = vrot.slane %v29, 1
  %v125 = vsel %vm122, %v123, %v124
  %v126 = vrot.slane %v31, 1
  %v127 = vsel %vm122, %v124, %v126
  %v128 = vrot.slane %v33, 1
  %v129 = vsel %vm122, %v126, %v128
  %v130 = vrot.slane %v35, 1
  %v131 = vsel %vm122, %v128, %v130
  %v132 = vrot.slane %v37, 1
  %v133 = vsel %vm122, %v130, %v132
  %v134 = vrot.slane %v39, 1
  %v135 = vsel %vm122, %v132, %v134
  %v136 = vrot.slane %v41, 1
  %v137 = vsel %vm122, %v134, %v136
  %v138 = vrot.slane %v43, 1
  %v139 = vsel %vm122, %v136, %v138
  %v140 = vrot.slane %v45, 1
  %v141 = vsel %vm122, %v138, %v140
  %v142 = vrot.slane %v47, 1
  %v143 = vsel %vm122, %v140, %v142
  %v144 = vrot.slane %v49, 1
  %v145 = vsel %vm122, %v142, %v144
  %v146 = vrot.slane %v51, 1
  %v147 = vsel %vm122, %v144, %v146
  %v148 = vrot.slane %v53, 1
  %v149 = vsel %vm122, %v146, %v148
  %v150 = vrot.slane %v55, 1
  %v151 = vsel %vm122, %v148, %v150
  %v152 = vrot.slane %v57, 1
  %v153 = vsel %vm122, %v150, %v152
  %v171 = vsel %vm122, %v152, %v123
  %v172 = vadd.f32 %v59, %v125
  %v173 = vadd.f32 %v61, %v127
  %v174 = vadd.f32 %v63, %v129
  %v175 = vadd.f32 %v65, %v131
  %v176 = vadd.f32 %v67, %v133
  %v177 = vadd.f32 %v69, %v135
  %v178 = vadd.f32 %v71, %v137
  %v179 = vadd.f32 %v73, %v139
  %v180 = vadd.f32 %v75, %v141
  %v181 = vadd.f32 %v77, %v143
  %v182 = vadd.f32 %v79, %v145
  %v183 = vadd.f32 %v81, %v147
  %v184 = vadd.f32 %v83, %v149
  %v185 = vadd.f32 %v85, %v151
  %v186 = vadd.f32 %v87, %v153
  %v187 = vadd.f32 %v89, %v171
  %v204 = vrot.slane %v90, 1
  %v205 = vrot.slane %v91, 1
  %v206 = vsel %vm122, %v204, %v205
  %v207 = vrot.slane %v92, 1
  %v208 = vsel %vm122, %v205, %v207
  %v209 = vrot.slane %v93, 1
  %v210 = vsel %vm122, %v207, %v209
  %v211 = vrot.slane %v94, 1
  %v212 = vsel %vm122, %v209, %v211
  %v213 = vrot.slane %v95, 1
  %v214 = vsel %vm122, %v211, %v213
  %v215 = vrot.slane %v96, 1
  %v216 = vsel %vm122, %v213, %v215
  %v217 = vrot.slane %v97, 1
  %v218 = vsel %vm122, %v215, %v217
  %v219 = vrot.slane %v98, 1
  %v220 = vsel %vm122, %v217, %v219
  %v221 = vrot.slane %v99, 1
  %v222 = vsel %vm122, %v219, %v221
  %v223 = vrot.slane %v100, 1
  %v224 = vsel %vm122, %v221, %v223
  %v225 = vrot.slane %v101, 1
  %v226 = vsel %vm122, %v223, %v225
  %v227 = vrot.slane %v102, 1
  %v228 = vsel %vm122, %v225, %v227
  %v229 = vrot.slane %v103, 1
  %v230 = vsel %vm122, %v227, %v229
  %v231 = vrot.slane %v104, 1
  %v232 = vsel %vm122, %v229, %v231
  %v233 = vrot.slane %v105, 1
  %v234 = vsel %vm122, %v231, %v233
  %v237 = vsel %vm122, %v233, %v204
  %v254 = vrot.slane %v172, 1
  %v255 = vrot.slane %v173, 1
  %v256 = vsel %vm122, %v254, %v255
  %v257 = vrot.slane %v174, 1
  %v258 = vsel %vm122, %v255, %v257
  %v259 = vrot.slane %v175, 1
  %v260 = vsel %vm122, %v257, %v259
  %v261 = vrot.slane %v176, 1
  %v262 = vsel %vm122, %v259, %v261
  %v263 = vrot.slane %v177, 1
  %v264 = vsel %vm122, %v261, %v263
  %v265 = vrot.slane %v178, 1
  %v266 = vsel %vm122, %v263, %v265
  %v267 = vrot.slane %v179, 1
  %v268 = vsel %vm122, %v265, %v267
  %v269 = vrot.slane %v180, 1
  %v270 = vsel %vm122, %v267, %v269
  %v271 = vrot.slane %v181, 1
  %v272 = vsel %vm122, %v269, %v271
  %v273 = vrot.slane %v182, 1
  %v274 = vsel %vm122, %v271, %v273
  %v275 = vrot.slane %v183, 1
  %v276 = vsel %vm122, %v273, %v275
  %v277 = vrot.slane %v184, 1
  %v278 = vsel %vm122, %v275, %v277
  %v279 = vrot.slane %v185, 1
  %v280 = vsel %vm122, %v277, %v279
  %v281 = vrot.slane %v186, 1
  %v282 = vsel %vm122, %v279, %v281
  %v283 = vrot.slane %v187, 1
  %v284 = vsel %vm122, %v281, %v283
  %v287 = vsel %vm122, %v283, %v254
  %vm288 = vcmask 1045504
  %v289 = vrot.slane %v90, 2
  %v290 = vrot.slane %v91, 2
  %v291 = vsel %vm288, %v289, %v290
  %v292 = vrot.slane %v92, 2
  %v293 = vsel %vm288, %v290, %v292
  %v294 = vrot.slane %v93, 2
  %v295 = vsel %vm288, %v292, %v294
  %v296 = vrot.slane %v94, 2
  %v297 = vsel %vm288, %v294, %v296
  %v298 = vrot.slane %v95, 2
  %v299 = vsel %vm288, %v296, %v298
  %v300 = vrot.slane %v96, 2
  %v301 = vsel %vm288, %v298, %v300
  %v302 = vrot.slane %v97, 2
  %v303 = vsel %vm288, %v300, %v302
  %v304 = vrot.slane %v98, 2
  %v305 = vsel %vm288, %v302, %v304
  %v306 = vrot.slane %v99, 2
  %v307 = vsel %vm288, %v304, %v306
  %v308 = vrot.slane %v100, 2
  %v309 = vsel %vm288, %v306, %v308
  %v310 = vrot.slane %v101, 2
  %v311 = vsel %vm288, %v308, %v310
  %v312 = vrot.slane %v102, 2
  %v313 = vsel %vm288, %v310, %v312
  %v314 = vrot.slane %v103, 2
  %v315 = vsel %vm288, %v312, %v314
  %v316 = vrot.slane %v104, 2
  %v317 = vsel %vm288, %v314, %v316
  %v318 = vrot.slane %v105, 2
  %v319 = vsel %vm288, %v316, %v318
  %v337 = vsel %vm288, %v318, %v289
  %338 = vrot.lane.b32.xlu0 %v172, 32
  %v339 = vpop.permute.xlu0 %338
  %340 = vrot.lane.b32.xlu0 %v173, 32
  %v341 = vpop.permute.xlu0 %340
  %342 = vrot.lane.b32.xlu0 %v174, 32
  %v343 = vpop.permute.xlu0 %342
  %344 = vrot.lane.b32.xlu0 %v175, 32
  %v345 = vpop.permute.xlu0 %344
  %346 = vrot.lane.b32.xlu0 %v176, 32
  %v347 = vpop.permute.xlu0 %346
  %348 = vrot.lane.b32.xlu0 %v177, 32
  %v349 = vpop.permute.xlu0 %348
  %350 = vrot.lane.b32.xlu0 %v178, 32
  %v351 = vpop.permute.xlu0 %350
  %352 = vrot.lane.b32.xlu0 %v179, 32
  %v353 = vpop.permute.xlu0 %352
  %354 = vrot.lane.b32.xlu0 %v180, 32
  %v355 = vpop.permute.xlu0 %354
  %356 = vrot.lane.b32.xlu0 %v181, 32
  %v357 = vpop.permute.xlu0 %356
  %358 = vrot.lane.b32.xlu0 %v182, 32
  %v359 = vpop.permute.xlu0 %358
  %360 = vrot.lane.b32.xlu0 %v183, 32
  %v361 = vpop.permute.xlu0 %360
  %362 = vrot.lane.b32.xlu0 %v184, 32
  %v363 = vpop.permute.xlu0 %362
  %364 = vrot.lane.b32.xlu0 %v185, 32
  %v365 = vpop.permute.xlu0 %364
  %366 = vrot.lane.b32.xlu0 %v186, 32
  %v367 = vpop.permute.xlu0 %366
  %368 = vrot.lane.b32.xlu0 %v187, 32
  %v369 = vpop.permute.xlu0 %368
  %387 = vrot.lane.b32.xlu0 %v206, 64
  %v388 = vpop.permute.xlu0 %387
  %389 = vrot.lane.b32.xlu0 %v208, 64
  %v390 = vpop.permute.xlu0 %389
  %391 = vrot.lane.b32.xlu0 %v210, 64
  %v392 = vpop.permute.xlu0 %391
  %393 = vrot.lane.b32.xlu0 %v212, 64
  %v394 = vpop.permute.xlu0 %393
  %395 = vrot.lane.b32.xlu0 %v214, 64
  %v396 = vpop.permute.xlu0 %395
  %397 = vrot.lane.b32.xlu0 %v216, 64
  %v398 = vpop.permute.xlu0 %397
  %399 = vrot.lane.b32.xlu0 %v218, 64
  %v400 = vpop.permute.xlu0 %399
  %401 = vrot.lane.b32.xlu0 %v220, 64
  %v402 = vpop.permute.xlu0 %401
  %403 = vrot.lane.b32.xlu0 %v222, 64
  %v404 = vpop.permute.xlu0 %403
  %405 = vrot.lane.b32.xlu0 %v224, 64
  %v406 = vpop.permute.xlu0 %405
  %407 = vrot.lane.b32.xlu0 %v226, 64
  %v408 = vpop.permute.xlu0 %407
  %409 = vrot.lane.b32.xlu0 %v228, 64
  %v410 = vpop.permute.xlu0 %409
  %411 = vrot.lane.b32.xlu0 %v230, 64
  %v412 = vpop.permute.xlu0 %411
  %413 = vrot.lane.b32.xlu0 %v232, 64
  %v414 = vpop.permute.xlu0 %413
  %415 = vrot.lane.b32.xlu0 %v234, 64
  %v416 = vpop.permute.xlu0 %415
  %417 = vrot.lane.b32.xlu0 %v237, 64
  %v418 = vpop.permute.xlu0 %417
  %436 = vrot.lane.b32.xlu0 %v256, 96
  %v437 = vpop.permute.xlu0 %436
  %438 = vrot.lane.b32.xlu0 %v258, 96
  %v439 = vpop.permute.xlu0 %438
  %440 = vrot.lane.b32.xlu0 %v260, 96
  %v441 = vpop.permute.xlu0 %440
  %442 = vrot.lane.b32.xlu0 %v262, 96
  %v443 = vpop.permute.xlu0 %442
  %444 = vrot.lane.b32.xlu0 %v264, 96
  %v445 = vpop.permute.xlu0 %444
  %446 = vrot.lane.b32.xlu0 %v266, 96
  %v447 = vpop.permute.xlu0 %446
  %448 = vrot.lane.b32.xlu0 %v268, 96
  %v449 = vpop.permute.xlu0 %448
  %450 = vrot.lane.b32.xlu0 %v270, 96
  %v451 = vpop.permute.xlu0 %450
  %452 = vrot.lane.b32.xlu0 %v272, 96
  %v453 = vpop.permute.xlu0 %452
  %454 = vrot.lane.b32.xlu0 %v274, 96
  %v455 = vpop.permute.xlu0 %454
  %456 = vrot.lane.b32.xlu0 %v276, 96
  %v457 = vpop.permute.xlu0 %456
  %458 = vrot.lane.b32.xlu0 %v278, 96
  %v459 = vpop.permute.xlu0 %458
  %460 = vrot.lane.b32.xlu0 %v280, 96
  %v461 = vpop.permute.xlu0 %460
  %462 = vrot.lane.b32.xlu0 %v282, 96
  %v463 = vpop.permute.xlu0 %462
  %464 = vrot.lane.b32.xlu0 %v284, 96
  %v465 = vpop.permute.xlu0 %464
  %466 = vrot.lane.b32.xlu0 %v287, 96
  %v467 = vpop.permute.xlu0 %466
  %vm484 = vcmask 261120
  %v485 = vsel %vm484, %v90, %v339
  %v486 = vsel %vm484, %v91, %v341
  %v487 = vsel %vm484, %v92, %v343
  %v488 = vsel %vm484, %v93, %v345
  %v489 = vsel %vm484, %v94, %v347
  %v490 = vsel %vm484, %v95, %v349
  %v491 = vsel %vm484, %v96, %v351
  %v492 = vsel %vm484, %v97, %v353
  %v493 = vsel %vm484, %v98, %v355
  %v494 = vsel %vm484, %v99, %v357
  %v495 = vsel %vm484, %v100, %v359
  %v496 = vsel %vm484, %v101, %v361
  %v497 = vsel %vm484, %v102, %v363
  %v498 = vsel %vm484, %v103, %v365
  %v499 = vsel %vm484, %v104, %v367
  %v500 = vsel %vm484, %v105, %v369
  %vm501 = vcmask 523264
  %v502 = vsel %vm501, %v485, %v388
  %v503 = vsel %vm501, %v486, %v390
  %v504 = vsel %vm501, %v487, %v392
  %v505 = vsel %vm501, %v488, %v394
  %v506 = vsel %vm501, %v489, %v396
  %v507 = vsel %vm501, %v490, %v398
  %v508 = vsel %vm501, %v491, %v400
  %v509 = vsel %vm501, %v492, %v402
  %v510 = vsel %vm501, %v493, %v404
  %v511 = vsel %vm501, %v494, %v406
  %v512 = vsel %vm501, %v495, %v408
  %v513 = vsel %vm501, %v496, %v410
  %v514 = vsel %vm501, %v497, %v412
  %v515 = vsel %vm501, %v498, %v414
  %v516 = vsel %vm501, %v499, %v416
  %v517 = vsel %vm501, %v500, %v418
  %vm518 = vcmask 785408
  %v519 = vsel %vm518, %v502, %v437
  %v520 = vsel %vm518, %v503, %v439
  %v521 = vsel %vm518, %v504, %v441
  %v522 = vsel %vm518, %v505, %v443
  %v523 = vsel %vm518, %v506, %v445
  %v524 = vsel %vm518, %v507, %v447
  %v525 = vsel %vm518, %v508, %v449
  %v526 = vsel %vm518, %v509, %v451
  %v527 = vsel %vm518, %v510, %v453
  %v528 = vsel %vm518, %v511, %v455
  %v529 = vsel %vm518, %v512, %v457
  %v530 = vsel %vm518, %v513, %v459
  %v531 = vsel %vm518, %v514, %v461
  %v532 = vsel %vm518, %v515, %v463
  %v533 = vsel %vm518, %v516, %v465
  %v534 = vsel %vm518, %v517, %v467
  %v535 = vpack.c.bf16 %v520, %v519
  %v536 = vpack.c.bf16 %v293, %v291
  %v537 = vpack.c.bf16 %v522, %v521
  %v538 = vpack.c.bf16 %v297, %v295
  %v539 = vpack.c.bf16 %v524, %v523
  %v540 = vpack.c.bf16 %v301, %v299
  %v541 = vpack.c.bf16 %v526, %v525
  %v542 = vpack.c.bf16 %v305, %v303
  %v543 = vpack.c.bf16 %v528, %v527
  %v544 = vpack.c.bf16 %v309, %v307
  %v545 = vpack.c.bf16 %v530, %v529
  %v546 = vpack.c.bf16 %v313, %v311
  %v547 = vpack.c.bf16 %v532, %v531
  %v548 = vpack.c.bf16 %v317, %v315
  %v549 = vpack.c.bf16 %v534, %v533
  %v550 = vpack.c.bf16 %v337, %v319
  %v551 = vld [vmem:[%s1] sm:$0xf]
  %v552 = vld [vmem:[%s1 + $0x4] sm:$0xf]
  %v553 = vld [vmem:[%s1 + $0x8] sm:$0xf]
  %v554 = vld [vmem:[%s1 + $0xc] sm:$0xf]
  %v555 = vld [vmem:[%s1 + $0x10] sm:$0xf]
  %v556 = vld [vmem:[%s1 + $0x14] sm:$0xf]
  %v557 = vld [vmem:[%s1 + $0x18] sm:$0xf]
  %v558 = vld [vmem:[%s1 + $0x1c] sm:$0xf]
  %v559 = vld [vmem:[%s1 + $0x20] sm:$0xf]
  %v560 = vld [vmem:[%s1 + $0x24] sm:$0xf]
  %v561 = vld [vmem:[%s1 + $0x28] sm:$0xf]
  %v562 = vld [vmem:[%s1 + $0x2c] sm:$0xf]
  %v563 = vld [vmem:[%s1 + $0x30] sm:$0xf]
  %v564 = vld [vmem:[%s1 + $0x34] sm:$0xf]
  %v565 = vld [vmem:[%s1 + $0x38] sm:$0xf]
  %v566 = vld [vmem:[%s1 + $0x3c] sm:$0xf]
  %v567 = vld [vmem:[%s1 + $0x40] sm:$0xf]
  %v568 = vld [vmem:[%s1 + $0x44] sm:$0xf]
  %v569 = vld [vmem:[%s1 + $0x48] sm:$0xf]
  %v570 = vld [vmem:[%s1 + $0x4c] sm:$0xf]
  %v571 = vld [vmem:[%s2] sm:$0x1]
  %v573 = vlaneseq
  %v574 = vshrl.u32 %v573, 7
  %v575 = vsub.s32 0, %v574
  %v576 = vrot.slane %v571, %v575
  %v598 = vunpack.c.l.b16 %v551
  %v599 = vunpack.c.l.b16 %v552
  %v600 = vunpack.c.l.b16 %v553
  %v601 = vunpack.c.l.b16 %v554
  %v602 = vunpack.c.l.b16 %v555
  %v603 = vunpack.c.l.b16 %v556
  %v604 = vunpack.c.l.b16 %v557
  %v605 = vunpack.c.l.b16 %v558
  %v606 = vunpack.c.l.b16 %v559
  %v607 = vunpack.c.l.b16 %v560
  %v608 = vunpack.c.l.b16 %v561
  %v609 = vunpack.c.l.b16 %v562
  %v610 = vunpack.c.l.b16 %v563
  %v611 = vunpack.c.l.b16 %v564
  %v612 = vunpack.c.l.b16 %v565
  %v613 = vunpack.c.l.b16 %v566
  %v614 = vunpack.c.l.b16 %v567
  %v615 = vunpack.c.l.b16 %v568
  %v616 = vunpack.c.l.b16 %v569
  %v617 = vunpack.c.l.b16 %v570
  %v618 = vpack.c.b16 %v599, %v598
  %v619 = vpack.c.b16 %v601, %v600
  %v620 = vpack.c.b16 %v603, %v602
  %v621 = vpack.c.b16 %v605, %v604
  %v622 = vpack.c.b16 %v607, %v606
  %v623 = vpack.c.b16 %v609, %v608
  %v624 = vpack.c.b16 %v611, %v610
  %v625 = vpack.c.b16 %v613, %v612
  %v626 = vpack.c.b16 %v615, %v614
  %v627 = vpack.c.b16 %v617, %v616
  %v639 = vsel %vm484, %v536, 0
  %v642 = vsel %vm484, %v538, 0
  %v645 = vsel %vm484, %v540, 0
  %v648 = vsel %vm484, %v542, 0
  %v651 = vsel %vm484, %v544, 0
  %v654 = vsel %vm484, %v546, 0
  %v657 = vsel %vm484, %v548, 0
  %v660 = vsel %vm484, %v550, 0
  %662 = vmatprep.subr.bf16.mxu0 0
  %663 = vmatpush1.bf16.msra.mxu0 %v618
  %664 = vmatprep.subr.bf16.mxu0 0
  %665 = vmatpush1.bf16.msra.mxu0 %v619
  %666 = vmatprep.subr.bf16.mxu0 0
  %667 = vmatpush1.bf16.msra.mxu0 %v620
  %668 = vmatprep.subr.bf16.mxu0 0
  %669 = vmatpush1.bf16.msra.mxu0 %v621
  %670 = vmatprep.subr.bf16.mxu0 0
  %671 = vmatpush1.bf16.msra.mxu0 %v622
  %672 = vmatprep.subr.bf16.mxu0 0
  %673 = vmatpush1.bf16.msra.mxu0 %v623
  %674 = vmatprep.subr.bf16.mxu0 0
  %675 = vmatpush1.bf16.msra.mxu0 %v624
  %676 = vmatprep.subr.bf16.mxu0 0
  %677 = vmatpush1.bf16.msra.mxu0 %v625
  %678 = vmatprep.subr.bf16.mxu0 0
  %679 = vmatpush1.bf16.msra.mxu0 %v626
  %680 = vmatprep.subr.bf16.mxu0 0
  %681 = vmatpush1.bf16.msra.mxu0 %v627
  %682 = vmatprep.subr.bf16.mxu0 0
  %683 = vmatpush1.bf16.msra.mxu0 0
  %684 = vmatprep.subr.bf16.mxu0 0
  %685 = vmatpush1.bf16.msra.mxu0 0
  %686 = vmatprep.subr.bf16.mxu0 0
  %687 = vmatpush1.bf16.msra.mxu0 0
  %688 = vmatprep.subr.bf16.mxu0 0
  %689 = vmatpush1.bf16.msra.mxu0 0
  %690 = vmatprep.subr.bf16.mxu0 0
  %691 = vmatpush1.bf16.msra.mxu0 0
  %692 = vmatprep.subr.bf16.mxu0 0
  %693 = vmatpush1.bf16.msra.mxu0 0
  %694 = vmatprep.mubr.bf16.mxu0 %v639
  %695 = vmatmul.mubr.bf16.gmra.mrb[0].mxu0 %v535
  %v696 = vpop.f32.mrb[0].mxu0
  %v697 = vadd.f32 %v576, %v696
  %v698 = vpop.f32.mrb[0].mxu0
  %v699 = vpop.f32.mrb[0].mxu0
  %v700 = vadd.f32 %v576, %v699
  %v701 = vpop.f32.mrb[0].mxu0
  %702 = vmatprep.mubr.bf16.mxu0 %v642
  %703 = vmatmul.mubr.bf16.gmra.mrb[0].mxu0 %v537
  %v704 = vpop.f32.mrb[0].mxu0
  %v705 = vadd.f32 %v576, %v704
  %v706 = vpop.f32.mrb[0].mxu0
  %v707 = vpop.f32.mrb[0].mxu0
  %v708 = vadd.f32 %v576, %v707
  %v709 = vpop.f32.mrb[0].mxu0
  %710 = vmatprep.mubr.bf16.mxu0 %v645
  %711 = vmatmul.mubr.bf16.gmra.mrb[0].mxu0 %v539
  %v712 = vpop.f32.mrb[0].mxu0
  %v713 = vadd.f32 %v576, %v712
  %v714 = vpop.f32.mrb[0].mxu0
  %v715 = vpop.f32.mrb[0].mxu0
  %v716 = vadd.f32 %v576, %v715
  %v717 = vpop.f32.mrb[0].mxu0
  %718 = vmatprep.mubr.bf16.mxu0 %v648
  %719 = vmatmul.mubr.bf16.gmra.mrb[0].mxu0 %v541
  %v720 = vpop.f32.mrb[0].mxu0
  %v721 = vadd.f32 %v576, %v720
  %v722 = vpop.f32.mrb[0].mxu0
  %v723 = vpop.f32.mrb[0].mxu0
  %v724 = vadd.f32 %v576, %v723
  %v725 = vpop.f32.mrb[0].mxu0
  %726 = vmatprep.mubr.bf16.mxu0 %v651
  %727 = vmatmul.mubr.bf16.gmra.mrb[0].mxu0 %v543
  %v728 = vpop.f32.mrb[0].mxu0
  %v729 = vadd.f32 %v576, %v728
  %v730 = vpop.f32.mrb[0].mxu0
  %v731 = vpop.f32.mrb[0].mxu0
  %v732 = vadd.f32 %v576, %v731
  %v733 = vpop.f32.mrb[0].mxu0
  %734 = vmatprep.mubr.bf16.mxu0 %v654
  %735 = vmatmul.mubr.bf16.gmra.mrb[0].mxu0 %v545
  %v736 = vpop.f32.mrb[0].mxu0
  %v737 = vadd.f32 %v576, %v736
  %v738 = vpop.f32.mrb[0].mxu0
  %v739 = vpop.f32.mrb[0].mxu0
  %v740 = vadd.f32 %v576, %v739
  %v741 = vpop.f32.mrb[0].mxu0
  %742 = vmatprep.mubr.bf16.mxu0 %v657
  %743 = vmatmul.mubr.bf16.gmra.mrb[0].mxu0 %v547
  %v744 = vpop.f32.mrb[0].mxu0
  %v745 = vadd.f32 %v576, %v744
  %v746 = vpop.f32.mrb[0].mxu0
  %v747 = vpop.f32.mrb[0].mxu0
  %v748 = vadd.f32 %v576, %v747
  %v749 = vpop.f32.mrb[0].mxu0
  %750 = vmatprep.mubr.bf16.mxu0 %v660
  %751 = vmatmul.mubr.bf16.gmra.mrb[0].mxu0 %v549
  %v752 = vpop.f32.mrb[0].mxu0
  %v753 = vadd.f32 %v576, %v752
  %v754 = vpop.f32.mrb[0].mxu0
  %v755 = vpop.f32.mrb[0].mxu0
  %v756 = vadd.f32 %v576, %v755
  %v757 = vpop.f32.mrb[0].mxu0
  %758 = vdwg.mxu0
  %v759 = vmax.f32 %v697, 0.0
  %v760 = vmax.f32 %v700, 0.0
  %v761 = vmax.f32 %v705, 0.0
  %v762 = vmax.f32 %v708, 0.0
  %v763 = vmax.f32 %v713, 0.0
  %v764 = vmax.f32 %v716, 0.0
  %v765 = vmax.f32 %v721, 0.0
  %v766 = vmax.f32 %v724, 0.0
  %v767 = vmax.f32 %v729, 0.0
  %v768 = vmax.f32 %v732, 0.0
  %v769 = vmax.f32 %v737, 0.0
  %v770 = vmax.f32 %v740, 0.0
  %v771 = vmax.f32 %v745, 0.0
  %v772 = vmax.f32 %v748, 0.0
  %v773 = vmax.f32 %v753, 0.0
  %v774 = vmax.f32 %v756, 0.0
  %vm775 = vcmask 687104
  %776 = vst.msk [vmem:[#allocation2] sm:$0xff] %vm775, %v759
  %777 = vst.msk [vmem:[#allocation2 + $0x8] sm:$0xff] %vm775, %v760
  %778 = vst.msk [vmem:[#allocation2 + $0x10] sm:$0xff] %vm775, %v761
  %779 = vst.msk [vmem:[#allocation2 + $0x18] sm:$0xff] %vm775, %v762
  %780 = vst.msk [vmem:[#allocation2 + $0x20] sm:$0xff] %vm775, %v763
  %781 = vst.msk [vmem:[#allocation2 + $0x28] sm:$0xff] %vm775, %v764
  %782 = vst.msk [vmem:[#allocation2 + $0x30] sm:$0xff] %vm775, %v765
  %783 = vst.msk [vmem:[#allocation2 + $0x38] sm:$0xff] %vm775, %v766
  %784 = vst.msk [vmem:[#allocation2 + $0x40] sm:$0xff] %vm775, %v767
  %785 = vst.msk [vmem:[#allocation2 + $0x48] sm:$0xff] %vm775, %v768
  %786 = vst.msk [vmem:[#allocation2 + $0x50] sm:$0xff] %vm775, %v769
  %787 = vst.msk [vmem:[#allocation2 + $0x58] sm:$0xff] %vm775, %v770
  %788 = vst.msk [vmem:[#allocation2 + $0x60] sm:$0xff] %vm775, %v771
  %789 = vst.msk [vmem:[#allocation2 + $0x68] sm:$0xff] %vm775, %v772
  %790 = vst.msk [vmem:[#allocation2 + $0x70] sm:$0xff] %vm775, %v773
  %791 = vst.msk [vmem:[#allocation2 + $0x78] sm:$0xff] %vm775, %v774
  %v792 = vld [vmem:[#allocation2] ss:$2 sm:$0xff]
  %s793 = scalar_lea.vmem [#allocation2], 16
  %v794 = vld [vmem:[%s793] ss:$2 sm:$0xff]
  %s795 = scalar_lea.vmem [#allocation2], 32
  %v796 = vld [vmem:[%s795] ss:$2 sm:$0xff]
  %s797 = scalar_lea.vmem [#allocation2], 48
  %v798 = vld [vmem:[%s797] ss:$2 sm:$0xff]
  %s799 = scalar_lea.vmem [#allocation2], 64
  %v800 = vld [vmem:[%s799] ss:$2 sm:$0xff]
  %s801 = scalar_lea.vmem [#allocation2], 80
  %v802 = vld [vmem:[%s801] ss:$2 sm:$0xff]
  %s803 = scalar_lea.vmem [#allocation2], 96
  %v804 = vld [vmem:[%s803] ss:$2 sm:$0xff]
  %s805 = scalar_lea.vmem [#allocation2], 112
  %v806 = vld [vmem:[%s805] ss:$2 sm:$0xff]
  %s807 = scalar_lea.vmem [#allocation2], 1
  %v808 = vld [vmem:[%s807] ss:$2 sm:$0xff]
  %s809 = scalar_lea.vmem [#allocation2], 17
  %v810 = vld [vmem:[%s809] ss:$2 sm:$0xff]
  %s811 = scalar_lea.vmem [#allocation2], 33
  %v812 = vld [vmem:[%s811] ss:$2 sm:$0xff]
  %s813 = scalar_lea.vmem [#allocation2], 49
  %v814 = vld [vmem:[%s813] ss:$2 sm:$0xff]
  %s815 = scalar_lea.vmem [#allocation2], 65
  %v816 = vld [vmem:[%s815] ss:$2 sm:$0xff]
  %s817 = scalar_lea.vmem [#allocation2], 81
  %v818 = vld [vmem:[%s817] ss:$2 sm:$0xff]
  %s819 = scalar_lea.vmem [#allocation2], 97
  %v820 = vld [vmem:[%s819] ss:$2 sm:$0xff]
  %s821 = scalar_lea.vmem [#allocation2], 113
  %v822 = vld [vmem:[%s821] ss:$2 sm:$0xff]
  %v823 = vadd.f32 %v792, %v808
  %v824 = vadd.f32 %v794, %v810
  %v825 = vadd.f32 %v796, %v812
  %v826 = vadd.f32 %v798, %v814
  %v827 = vadd.f32 %v800, %v816
  %v828 = vadd.f32 %v802, %v818
  %v829 = vadd.f32 %v804, %v820
  %v830 = vadd.f32 %v806, %v822
  %v839 = vrot.slane %v792, 1
  %v840 = vrot.slane %v794, 1
  %v841 = vsel %vm122, %v839, %v840
  %v842 = vrot.slane %v796, 1
  %v843 = vsel %vm122, %v840, %v842
  %v844 = vrot.slane %v798, 1
  %v845 = vsel %vm122, %v842, %v844
  %v846 = vrot.slane %v800, 1
  %v847 = vsel %vm122, %v844, %v846
  %v848 = vrot.slane %v802, 1
  %v849 = vsel %vm122, %v846, %v848
  %v850 = vrot.slane %v804, 1
  %v851 = vsel %vm122, %v848, %v850
  %v852 = vrot.slane %v806, 1
  %v853 = vsel %vm122, %v850, %v852
  %v863 = vsel %vm122, %v852, %v839
  %v864 = vadd.f32 %v808, %v841
  %v865 = vadd.f32 %v810, %v843
  %v866 = vadd.f32 %v812, %v845
  %v867 = vadd.f32 %v814, %v847
  %v868 = vadd.f32 %v816, %v849
  %v869 = vadd.f32 %v818, %v851
  %v870 = vadd.f32 %v820, %v853
  %v871 = vadd.f32 %v822, %v863
  %v880 = vrot.slane %v823, 1
  %v881 = vrot.slane %v824, 1
  %v882 = vsel %vm122, %v880, %v881
  %v883 = vrot.slane %v825, 1
  %v884 = vsel %vm122, %v881, %v883
  %v885 = vrot.slane %v826, 1
  %v886 = vsel %vm122, %v883, %v885
  %v887 = vrot.slane %v827, 1
  %v888 = vsel %vm122, %v885, %v887
  %v889 = vrot.slane %v828, 1
  %v890 = vsel %vm122, %v887, %v889
  %v891 = vrot.slane %v829, 1
  %v892 = vsel %vm122, %v889, %v891
  %v893 = vrot.slane %v830, 1
  %v894 = vsel %vm122, %v891, %v893
  %v897 = vsel %vm122, %v893, %v880
  %v906 = vrot.slane %v864, 1
  %v907 = vrot.slane %v865, 1
  %v908 = vsel %vm122, %v906, %v907
  %v909 = vrot.slane %v866, 1
  %v910 = vsel %vm122, %v907, %v909
  %v911 = vrot.slane %v867, 1
  %v912 = vsel %vm122, %v909, %v911
  %v913 = vrot.slane %v868, 1
  %v914 = vsel %vm122, %v911, %v913
  %v915 = vrot.slane %v869, 1
  %v916 = vsel %vm122, %v913, %v915
  %v917 = vrot.slane %v870, 1
  %v918 = vsel %vm122, %v915, %v917
  %v919 = vrot.slane %v871, 1
  %v920 = vsel %vm122, %v917, %v919
  %v923 = vsel %vm122, %v919, %v906
  %v924 = vrot.slane %v823, 2
  %v925 = vrot.slane %v824, 2
  %v926 = vsel %vm288, %v924, %v925
  %v927 = vrot.slane %v825, 2
  %v928 = vsel %vm288, %v925, %v927
  %v929 = vrot.slane %v826, 2
  %v930 = vsel %vm288, %v927, %v929
  %v931 = vrot.slane %v827, 2
  %v932 = vsel %vm288, %v929, %v931
  %v933 = vrot.slane %v828, 2
  %v934 = vsel %vm288, %v931, %v933
  %v935 = vrot.slane %v829, 2
  %v936 = vsel %vm288, %v933, %v935
  %v937 = vrot.slane %v830, 2
  %v938 = vsel %vm288, %v935, %v937
  %v941 = vsel %vm288, %v937, %v924
  %942 = vrot.lane.b32.xlu0 %v864, 84
  %v943 = vpop.permute.xlu0 %942
  %944 = vrot.lane.b32.xlu0 %v865, 84
  %v945 = vpop.permute.xlu0 %944
  %946 = vrot.lane.b32.xlu0 %v866, 84
  %v947 = vpop.permute.xlu0 %946
  %948 = vrot.lane.b32.xlu0 %v867, 84
  %v949 = vpop.permute.xlu0 %948
  %950 = vrot.lane.b32.xlu0 %v868, 84
  %v951 = vpop.permute.xlu0 %950
  %952 = vrot.lane.b32.xlu0 %v869, 84
  %v953 = vpop.permute.xlu0 %952
  %954 = vrot.lane.b32.xlu0 %v870, 84
  %v955 = vpop.permute.xlu0 %954
  %956 = vrot.lane.b32.xlu0 %v871, 84
  %v957 = vpop.permute.xlu0 %956
  %967 = vrot.lane.b32.xlu0 %v882, 40
  %v968 = vpop.permute.xlu0 %967
  %969 = vrot.lane.b32.xlu0 %v884, 40
  %v970 = vpop.permute.xlu0 %969
  %971 = vrot.lane.b32.xlu0 %v886, 40
  %v972 = vpop.permute.xlu0 %971
  %973 = vrot.lane.b32.xlu0 %v888, 40
  %v974 = vpop.permute.xlu0 %973
  %975 = vrot.lane.b32.xlu0 %v890, 40
  %v976 = vpop.permute.xlu0 %975
  %977 = vrot.lane.b32.xlu0 %v892, 40
  %v978 = vpop.permute.xlu0 %977
  %979 = vrot.lane.b32.xlu0 %v894, 40
  %v980 = vpop.permute.xlu0 %979
  %981 = vrot.lane.b32.xlu0 %v897, 40
  %v982 = vpop.permute.xlu0 %981
  %992 = vrot.lane.b32.xlu0 %v908, 124
  %v993 = vpop.permute.xlu0 %992
  %994 = vrot.lane.b32.xlu0 %v910, 124
  %v995 = vpop.permute.xlu0 %994
  %996 = vrot.lane.b32.xlu0 %v912, 124
  %v997 = vpop.permute.xlu0 %996
  %998 = vrot.lane.b32.xlu0 %v914, 124
  %v999 = vpop.permute.xlu0 %998
  %1000 = vrot.lane.b32.xlu0 %v916, 124
  %v1001 = vpop.permute.xlu0 %1000
  %1002 = vrot.lane.b32.xlu0 %v918, 124
  %v1003 = vpop.permute.xlu0 %1002
  %1004 = vrot.lane.b32.xlu0 %v920, 124
  %v1005 = vpop.permute.xlu0 %1004
  %1006 = vrot.lane.b32.xlu0 %v923, 124
  %v1007 = vpop.permute.xlu0 %1006
  %1017 = vrot.lane.b32.xlu0 %v926, 80
  %v1018 = vpop.permute.xlu0 %1017
  %1019 = vrot.lane.b32.xlu0 %v928, 80
  %v1020 = vpop.permute.xlu0 %1019
  %1021 = vrot.lane.b32.xlu0 %v930, 80
  %v1022 = vpop.permute.xlu0 %1021
  %1023 = vrot.lane.b32.xlu0 %v932, 80
  %v1024 = vpop.permute.xlu0 %1023
  %1025 = vrot.lane.b32.xlu0 %v934, 80
  %v1026 = vpop.permute.xlu0 %1025
  %1027 = vrot.lane.b32.xlu0 %v936, 80
  %v1028 = vpop.permute.xlu0 %1027
  %1029 = vrot.lane.b32.xlu0 %v938, 80
  %v1030 = vpop.permute.xlu0 %1029
  %1031 = vrot.lane.b32.xlu0 %v941, 80
  %v1032 = vpop.permute.xlu0 %1031
  %v1041 = vsel %vm775, %v823, %v943
  %v1042 = vsel %vm775, %v824, %v945
  %v1043 = vsel %vm775, %v825, %v947
  %v1044 = vsel %vm775, %v826, %v949
  %v1045 = vsel %vm775, %v827, %v951
  %v1046 = vsel %vm775, %v828, %v953
  %v1047 = vsel %vm775, %v829, %v955
  %v1048 = vsel %vm775, %v830, %v957
  %vm1049 = vcmask 326656
  %v1050 = vsel %vm1049, %v943, %v968
  %v1051 = vsel %vm1049, %v945, %v970
  %v1052 = vsel %vm1049, %v947, %v972
  %v1053 = vsel %vm1049, %v949, %v974
  %v1054 = vsel %vm1049, %v951, %v976
  %v1055 = vsel %vm1049, %v953, %v978
  %v1056 = vsel %vm1049, %v955, %v980
  %v1057 = vsel %vm1049, %v957, %v982
  %vm1058 = vcmask 1014784
  %v1059 = vsel %vm1058, %v1050, %v993
  %v1060 = vsel %vm1058, %v1051, %v995
  %v1061 = vsel %vm1058, %v1052, %v997
  %v1062 = vsel %vm1058, %v1053, %v999
  %v1063 = vsel %vm1058, %v1054, %v1001
  %v1064 = vsel %vm1058, %v1055, %v1003
  %v1065 = vsel %vm1058, %v1056, %v1005
  %v1066 = vsel %vm1058, %v1057, %v1007
  %vm1067 = vcmask 654336
  %v1068 = vsel %vm1067, %v993, %v1018
  %v1069 = vsel %vm1067, %v995, %v1020
  %v1070 = vsel %vm1067, %v997, %v1022
  %v1071 = vsel %vm1067, %v999, %v1024
  %v1072 = vsel %vm1067, %v1001, %v1026
  %v1073 = vsel %vm1067, %v1003, %v1028
  %v1074 = vsel %vm1067, %v1005, %v1030
  %v1075 = vsel %vm1067, %v1007, %v1032
  %v1076 = vpack.c.bf16 %v1042, %v1041
  %v1077 = vpack.c.bf16 %v1060, %v1059
  %v1078 = vpack.c.bf16 %v1069, %v1068
  %v1079 = vpack.c.bf16 %v1020, %v1018
  %v1080 = vpack.c.bf16 %v1044, %v1043
  %v1081 = vpack.c.bf16 %v1062, %v1061
  %v1082 = vpack.c.bf16 %v1071, %v1070
  %v1083 = vpack.c.bf16 %v1024, %v1022
  %v1084 = vpack.c.bf16 %v1046, %v1045
  %v1085 = vpack.c.bf16 %v1064, %v1063
  %v1086 = vpack.c.bf16 %v1073, %v1072
  %v1087 = vpack.c.bf16 %v1028, %v1026
  %v1088 = vpack.c.bf16 %v1048, %v1047
  %v1089 = vpack.c.bf16 %v1066, %v1065
  %v1090 = vpack.c.bf16 %v1075, %v1074
  %v1091 = vpack.c.bf16 %v1032, %v1030
  %v1092 = vld [vmem:[%s3] sm:$0xf]
  %v1093 = vld [vmem:[%s3 + $0x4] sm:$0xf]
  %v1094 = vld [vmem:[%s3 + $0x8] sm:$0xf]
  %v1095 = vld [vmem:[%s3 + $0xc] sm:$0xf]
  %v1096 = vld [vmem:[%s3 + $0x10] sm:$0xf]
  %v1097 = vld [vmem:[%s3 + $0x14] sm:$0xf]
  %v1098 = vld [vmem:[%s3 + $0x18] sm:$0xf]
  %v1099 = vld [vmem:[%s3 + $0x1c] sm:$0xf]
  %v1100 = vld [vmem:[%s3 + $0x20] sm:$0xf]
  %v1101 = vld [vmem:[%s3 + $0x24] sm:$0xf]
  %v1102 = vld [vmem:[%s3 + $0x28] sm:$0xf]
  %v1103 = vld [vmem:[%s3 + $0x2c] sm:$0xf]
  %v1104 = vld [vmem:[%s3 + $0x30] sm:$0xf]
  %v1105 = vld [vmem:[%s3 + $0x34] sm:$0xf]
  %v1106 = vld [vmem:[%s3 + $0x38] sm:$0xf]
  %v1107 = vld [vmem:[%s3 + $0x3c] sm:$0xf]
  %v1108 = vld [vmem:[%s3 + $0x40] sm:$0xf]
  %v1109 = vld [vmem:[%s3 + $0x44] sm:$0xf]
  %v1110 = vld [vmem:[%s3 + $0x48] sm:$0xf]
  %v1111 = vld [vmem:[%s3 + $0x4c] sm:$0xf]
  %v1112 = vld [vmem:[%s3 + $0x50] sm:$0xf]
  %v1113 = vld [vmem:[%s3 + $0x54] sm:$0xf]
  %v1114 = vld [vmem:[%s3 + $0x58] sm:$0xf]
  %v1115 = vld [vmem:[%s3 + $0x5c] sm:$0xf]
  %v1116 = vld [vmem:[%s3 + $0x60] sm:$0xf]
  %v1117 = vld [vmem:[%s3 + $0x64] sm:$0xf]
  %v1118 = vld [vmem:[%s3 + $0x68] sm:$0xf]
  %v1119 = vld [vmem:[%s3 + $0x6c] sm:$0xf]
  %v1120 = vld [vmem:[%s3 + $0x70] sm:$0xf]
  %v1121 = vld [vmem:[%s3 + $0x74] sm:$0xf]
  %v1122 = vld [vmem:[%s3 + $0x78] sm:$0xf]
  %v1123 = vld [vmem:[%s3 + $0x7c] sm:$0xf]
  %v1124 = vld [vmem:[%s3 + $0x80] sm:$0xf]
  %v1125 = vld [vmem:[%s3 + $0x84] sm:$0xf]
  %v1126 = vld [vmem:[%s3 + $0x88] sm:$0xf]
  %v1127 = vld [vmem:[%s3 + $0x8c] sm:$0xf]
  %v1128 = vld [vmem:[%s3 + $0x90] sm:$0xf]
  %v1129 = vld [vmem:[%s3 + $0x94] sm:$0xf]
  %v1130 = vld [vmem:[%s3 + $0x98] sm:$0xf]
  %v1131 = vld [vmem:[%s3 + $0x9c] sm:$0xf]
  %v1132 = vld [vmem:[%s3 + $0xa0] sm:$0xf]
  %v1133 = vld [vmem:[%s3 + $0xa4] sm:$0xf]
  %v1134 = vld [vmem:[%s3 + $0xa8] sm:$0xf]
  %v1135 = vld [vmem:[%s3 + $0xac] sm:$0xf]
  %v1136 = vld [vmem:[%s3 + $0xb0] sm:$0xf]
  %v1137 = vld [vmem:[%s3 + $0xb4] sm:$0xf]
  %v1138 = vld [vmem:[%s3 + $0xb8] sm:$0xf]
  %v1139 = vld [vmem:[%s3 + $0xbc] sm:$0xf]
  %v1140 = vld [vmem:[%s3 + $0xc0] sm:$0xf]
  %v1141 = vld [vmem:[%s3 + $0xc4] sm:$0xf]
  %v1142 = vld [vmem:[%s3 + $0xc8] sm:$0xf]
  %v1143 = vld [vmem:[%s3 + $0xcc] sm:$0xf]
  %v1144 = vld [vmem:[%s3 + $0xd0] sm:$0x3]
  %v1145 = vld [vmem:[%s4] sm:$0x1]
  %v1147 = vlaneseq
  %v1148 = vshrl.u32 %v1147, 7
  %v1149 = vsub.s32 0, %v1148
  %v1150 = vrot.slane %v1145, %v1149
  %v1205 = vunpack.c.l.b16 %v1092
  %v1206 = vunpack.c.l.b16 %v1093
  %v1207 = vunpack.c.l.b16 %v1094
  %v1208 = vunpack.c.l.b16 %v1095
  %v1209 = vunpack.c.l.b16 %v1096
  %v1210 = vunpack.c.l.b16 %v1097
  %v1211 = vunpack.c.l.b16 %v1098
  %v1212 = vunpack.c.l.b16 %v1099
  %v1213 = vunpack.c.l.b16 %v1100
  %v1214 = vunpack.c.l.b16 %v1101
  %v1215 = vunpack.c.l.b16 %v1102
  %v1216 = vunpack.c.l.b16 %v1103
  %v1217 = vunpack.c.l.b16 %v1104
  %v1218 = vunpack.c.l.b16 %v1105
  %v1219 = vunpack.c.l.b16 %v1106
  %v1220 = vunpack.c.l.b16 %v1107
  %v1221 = vunpack.c.l.b16 %v1108
  %v1222 = vunpack.c.l.b16 %v1109
  %v1223 = vunpack.c.l.b16 %v1110
  %v1224 = vunpack.c.l.b16 %v1111
  %v1225 = vunpack.c.l.b16 %v1112
  %v1226 = vunpack.c.l.b16 %v1113
  %v1227 = vunpack.c.l.b16 %v1114
  %v1228 = vunpack.c.l.b16 %v1115
  %v1229 = vunpack.c.l.b16 %v1116
  %v1230 = vunpack.c.l.b16 %v1117
  %v1231 = vunpack.c.l.b16 %v1118
  %v1232 = vunpack.c.l.b16 %v1119
  %v1233 = vunpack.c.l.b16 %v1120
  %v1234 = vunpack.c.l.b16 %v1121
  %v1235 = vunpack.c.l.b16 %v1122
  %v1236 = vunpack.c.l.b16 %v1123
  %v1237 = vunpack.c.l.b16 %v1124
  %v1238 = vunpack.c.l.b16 %v1125
  %v1239 = vunpack.c.l.b16 %v1126
  %v1240 = vunpack.c.l.b16 %v1127
  %v1241 = vunpack.c.l.b16 %v1128
  %v1242 = vunpack.c.l.b16 %v1129
  %v1243 = vunpack.c.l.b16 %v1130
  %v1244 = vunpack.c.l.b16 %v1131
  %v1245 = vunpack.c.l.b16 %v1132
  %v1246 = vunpack.c.l.b16 %v1133
  %v1247 = vunpack.c.l.b16 %v1134
  %v1248 = vunpack.c.l.b16 %v1135
  %v1249 = vunpack.c.l.b16 %v1136
  %v1250 = vunpack.c.l.b16 %v1137
  %v1251 = vunpack.c.l.b16 %v1138
  %v1252 = vunpack.c.l.b16 %v1139
  %v1253 = vunpack.c.l.b16 %v1140
  %v1254 = vunpack.c.l.b16 %v1141
  %v1255 = vunpack.c.l.b16 %v1142
  %v1256 = vunpack.c.l.b16 %v1143
  %v1257 = vunpack.c.l.b16 %v1144
  %v1258 = vpack.c.b16 %v1206, %v1205
  %v1259 = vpack.c.b16 %v1208, %v1207
  %v1260 = vpack.c.b16 %v1210, %v1209
  %v1261 = vpack.c.b16 %v1212, %v1211
  %v1262 = vpack.c.b16 %v1214, %v1213
  %v1263 = vpack.c.b16 %v1216, %v1215
  %v1264 = vpack.c.b16 %v1218, %v1217
  %v1265 = vpack.c.b16 %v1220, %v1219
  %v1266 = vpack.c.b16 %v1222, %v1221
  %v1267 = vpack.c.b16 %v1224, %v1223
  %v1268 = vpack.c.b16 %v1226, %v1225
  %v1269 = vpack.c.b16 %v1228, %v1227
  %v1270 = vpack.c.b16 %v1230, %v1229
  %v1271 = vpack.c.b16 %v1232, %v1231
  %v1272 = vpack.c.b16 %v1234, %v1233
  %v1273 = vpack.c.b16 %v1236, %v1235
  %v1274 = vpack.c.b16 %v1238, %v1237
  %v1275 = vpack.c.b16 %v1240, %v1239
  %v1276 = vpack.c.b16 %v1242, %v1241
  %v1277 = vpack.c.b16 %v1244, %v1243
  %v1278 = vpack.c.b16 %v1246, %v1245
  %v1279 = vpack.c.b16 %v1248, %v1247
  %v1280 = vpack.c.b16 %v1250, %v1249
  %v1281 = vpack.c.b16 %v1252, %v1251
  %v1282 = vpack.c.b16 %v1254, %v1253
  %v1283 = vpack.c.b16 %v1256, %v1255
  %v1284 = vpack.c.b16 %v1257, %v1257
  %vm1311 = vcmask 293888
  %v1313 = vsel %vm1311, %v1079, 0
  %v1316 = vsel %vm1311, %v1083, 0
  %v1319 = vsel %vm1311, %v1087, 0
  %v1322 = vsel %vm1311, %v1091, 0
  %vm1324 = vcmask 1041408
  %v1326 = vsel %vm1324, %v1284, 0
  %1328 = vmatprep.subr.bf16.mxu0 0
  %1329 = vmatpush1.bf16.msra.mxu0 %v1258
  %1330 = vmatprep.subr.bf16.mxu0 0
  %1331 = vmatpush1.bf16.msra.mxu0 %v1259
  %1332 = vmatprep.subr.bf16.mxu0 0
  %1333 = vmatpush1.bf16.msra.mxu0 %v1260
  %1334 = vmatprep.subr.bf16.mxu0 0
  %1335 = vmatpush1.bf16.msra.mxu0 %v1261
  %1336 = vmatprep.subr.bf16.mxu0 0
  %1337 = vmatpush1.bf16.msra.mxu0 %v1262
  %1338 = vmatprep.subr.bf16.mxu0 0
  %1339 = vmatpush1.bf16.msra.mxu0 %v1263
  %1340 = vmatprep.subr.bf16.mxu0 0
  %1341 = vmatpush1.bf16.msra.mxu0 %v1264
  %1342 = vmatprep.subr.bf16.mxu0 0
  %1343 = vmatpush1.bf16.msra.mxu0 %v1265
  %1344 = vmatprep.subr.bf16.mxu0 0
  %1345 = vmatpush1.bf16.msra.mxu0 %v1266
  %1346 = vmatprep.subr.bf16.mxu0 0
  %1347 = vmatpush1.bf16.msra.mxu0 %v1267
  %1348 = vmatprep.subr.bf16.mxu0 0
  %1349 = vmatpush1.bf16.msra.mxu0 %v1268
  %1350 = vmatprep.subr.bf16.mxu0 0
  %1351 = vmatpush1.bf16.msra.mxu0 %v1269
  %1352 = vmatprep.subr.bf16.mxu0 0
  %1353 = vmatpush1.bf16.msra.mxu0 %v1270
  %1354 = vmatprep.subr.bf16.mxu0 0
  %1355 = vmatpush1.bf16.msra.mxu0 %v1271
  %1356 = vmatprep.subr.bf16.mxu0 0
  %1357 = vmatpush1.bf16.msra.mxu0 %v1272
  %1358 = vmatprep.subr.bf16.mxu0 0
  %1359 = vmatpush1.bf16.msra.mxu0 %v1273
  %1360 = vmatprep.mubr.bf16.mxu0 %v1077
  %1361 = vmatmul.mubr.bf16.gmra.mrb[0].mxu0 %v1076
  %v1362 = vpop.f32.mrb[0].mxu0
  %v1363 = vadd.f32 %v1150, %v1362
  %v1364 = vpop.f32.mrb[0].mxu0
  %v1365 = vpop.f32.mrb[0].mxu0
  %v1366 = vadd.f32 %v1150, %v1365
  %v1367 = vpop.f32.mrb[0].mxu0
  %1368 = vmatprep.mubr.bf16.mxu0 %v1081
  %1369 = vmatmul.mubr.bf16.gmra.mrb[0].mxu0 %v1080
  %v1370 = vpop.f32.mrb[0].mxu0
  %v1371 = vadd.f32 %v1150, %v1370
  %v1372 = vpop.f32.mrb[0].mxu0
  %v1373 = vpop.f32.mrb[0].mxu0
  %v1374 = vadd.f32 %v1150, %v1373
  %v1375 = vpop.f32.mrb[0].mxu0
  %1376 = vmatprep.mubr.bf16.mxu0 %v1085
  %1377 = vmatmul.mubr.bf16.gmra.mrb[0].mxu0 %v1084
  %v1378 = vpop.f32.mrb[0].mxu0
  %v1379 = vadd.f32 %v1150, %v1378
  %v1380 = vpop.f32.mrb[0].mxu0
  %v1381 = vpop.f32.mrb[0].mxu0
  %v1382 = vadd.f32 %v1150, %v1381
  %v1383 = vpop.f32.mrb[0].mxu0
  %1384 = vmatprep.mubr.bf16.mxu0 %v1089
  %1385 = vmatmul.mubr.bf16.gmra.mrb[0].mxu0 %v1088
  %v1386 = vpop.f32.mrb[0].mxu0
  %v1387 = vadd.f32 %v1150, %v1386
  %v1388 = vpop.f32.mrb[0].mxu0
  %v1389 = vpop.f32.mrb[0].mxu0
  %v1390 = vadd.f32 %v1150, %v1389
  %v1391 = vpop.f32.mrb[0].mxu0
  %1392 = vdwg.mxu0
  %1393 = vmatprep.subr.bf16.mxu0 0
  %1394 = vmatpush1.bf16.msra.mxu0 %v1274
  %1395 = vmatprep.subr.bf16.mxu0 0
  %1396 = vmatpush1.bf16.msra.mxu0 %v1275
  %1397 = vmatprep.subr.bf16.mxu0 0
  %1398 = vmatpush1.bf16.msra.mxu0 %v1276
  %1399 = vmatprep.subr.bf16.mxu0 0
  %1400 = vmatpush1.bf16.msra.mxu0 %v1277
  %1401 = vmatprep.subr.bf16.mxu0 0
  %1402 = vmatpush1.bf16.msra.mxu0 %v1278
  %1403 = vmatprep.subr.bf16.mxu0 0
  %1404 = vmatpush1.bf16.msra.mxu0 %v1279
  %1405 = vmatprep.subr.bf16.mxu0 0
  %1406 = vmatpush1.bf16.msra.mxu0 %v1280
  %1407 = vmatprep.subr.bf16.mxu0 0
  %1408 = vmatpush1.bf16.msra.mxu0 %v1281
  %1409 = vmatprep.subr.bf16.mxu0 0
  %1410 = vmatpush1.bf16.msra.mxu0 %v1282
  %1411 = vmatprep.subr.bf16.mxu0 0
  %1412 = vmatpush1.bf16.msra.mxu0 %v1283
  %1413 = vmatprep.subr.bf16.mxu0 0
  %1414 = vmatpush1.bf16.msra.mxu0 %v1326
  %1415 = vmatprep.subr.bf16.mxu0 0
  %1416 = vmatpush1.bf16.msra.mxu0 0
  %1417 = vmatprep.subr.bf16.mxu0 0
  %1418 = vmatpush1.bf16.msra.mxu0 0
  %1419 = vmatprep.subr.bf16.mxu0 0
  %1420 = vmatpush1.bf16.msra.mxu0 0
  %1421 = vmatprep.subr.bf16.mxu0 0
  %1422 = vmatpush1.bf16.msra.mxu0 0
  %1423 = vmatprep.subr.bf16.mxu0 0
  %1424 = vmatpush1.bf16.msra.mxu0 0
  %1425 = vmatprep.mubr.bf16.mxu0 %v1313
  %1426 = vmatmul.mubr.bf16.gmra.mrb[0].mxu0 %v1078
  %v1427 = vpop.f32.mrb[0].mxu0
  %v1428 = vadd.f32 %v1363, %v1427
  %v1429 = vpop.f32.mrb[0].mxu0
  %v1430 = vpop.f32.mrb[0].mxu0
  %v1431 = vadd.f32 %v1366, %v1430
  %v1432 = vpop.f32.mrb[0].mxu0
  %1433 = vmatprep.mubr.bf16.mxu0 %v1316
  %1434 = vmatmul.mubr.bf16.gmra.mrb[0].mxu0 %v1082
  %v1435 = vpop.f32.mrb[0].mxu0
  %v1436 = vadd.f32 %v1371, %v1435
  %v1437 = vpop.f32.mrb[0].mxu0
  %v1438 = vpop.f32.mrb[0].mxu0
  %v1439 = vadd.f32 %v1374, %v1438
  %v1440 = vpop.f32.mrb[0].mxu0
  %1441 = vmatprep.mubr.bf16.mxu0 %v1319
  %1442 = vmatmul.mubr.bf16.gmra.mrb[0].mxu0 %v1086
  %v1443 = vpop.f32.mrb[0].mxu0
  %v1444 = vadd.f32 %v1379, %v1443
  %v1445 = vpop.f32.mrb[0].mxu0
  %v1446 = vpop.f32.mrb[0].mxu0
  %v1447 = vadd.f32 %v1382, %v1446
  %v1448 = vpop.f32.mrb[0].mxu0
  %1449 = vmatprep.mubr.bf16.mxu0 %v1322
  %1450 = vmatmul.mubr.bf16.gmra.mrb[0].mxu0 %v1090
  %v1451 = vpop.f32.mrb[0].mxu0
  %v1452 = vadd.f32 %v1387, %v1451
  %v1453 = vpop.f32.mrb[0].mxu0
  %v1454 = vpop.f32.mrb[0].mxu0
  %v1455 = vadd.f32 %v1390, %v1454
  %v1456 = vpop.f32.mrb[0].mxu0
  %1457 = vdwg.mxu0
  %v1458 = vmax.f32 %v1428, 0.0
  %v1459 = vmax.f32 %v1431, 0.0
  %v1460 = vmax.f32 %v1436, 0.0
  %v1461 = vmax.f32 %v1439, 0.0
  %v1462 = vmax.f32 %v1444, 0.0
  %v1463 = vmax.f32 %v1447, 0.0
  %v1464 = vmax.f32 %v1452, 0.0
  %v1465 = vmax.f32 %v1455, 0.0
  %1466 = vst.msk [vmem:[#allocation3] sm:$0xff] %vm1067, %v1458
  %1467 = vst.msk [vmem:[#allocation3 + $0x8] sm:$0xff] %vm1067, %v1459
  %1468 = vst.msk [vmem:[#allocation3 + $0x10] sm:$0xff] %vm1067, %v1460
  %1469 = vst.msk [vmem:[#allocation3 + $0x18] sm:$0xff] %vm1067, %v1461
  %1470 = vst.msk [vmem:[#allocation3 + $0x20] sm:$0xff] %vm1067, %v1462
  %1471 = vst.msk [vmem:[#allocation3 + $0x28] sm:$0xff] %vm1067, %v1463
  %1472 = vst.msk [vmem:[#allocation3 + $0x30] sm:$0xff] %vm1067, %v1464
  %1473 = vst.msk [vmem:[#allocation3 + $0x38] sm:$0xff] %vm1067, %v1465
  %v1474 = vld [vmem:[#allocation3] ss:$8 sm:$0xf]
  %v1475 = vld [vmem:[#allocation3] ss:$8 sm:$0xf0]
  %v1476 = vor.u32 %v1474, %v1475
  %s1477 = scalar_lea.vmem [#allocation3], 1
  %v1478 = vld [vmem:[%s1477] ss:$8 sm:$0xf]
  %v1479 = vld [vmem:[%s1477] ss:$8 sm:$0xf0]
  %v1480 = vor.u32 %v1478, %v1479
  %s1481 = scalar_lea.vmem [#allocation3], 2
  %v1482 = vld [vmem:[%s1481] ss:$8 sm:$0xf]
  %v1483 = vld [vmem:[%s1481] ss:$8 sm:$0xf0]
  %v1484 = vor.u32 %v1482, %v1483
  %s1485 = scalar_lea.vmem [#allocation3], 3
  %v1486 = vld [vmem:[%s1485] ss:$8 sm:$0xf]
  %v1487 = vld [vmem:[%s1485] ss:$8 sm:$0xf0]
  %v1488 = vor.u32 %v1486, %v1487
  %s1489 = scalar_lea.vmem [#allocation3], 4
  %v1490 = vld [vmem:[%s1489] ss:$8 sm:$0xf]
  %v1491 = vld [vmem:[%s1489] ss:$8 sm:$0xf0]
  %v1492 = vor.u32 %v1490, %v1491
  %1494 = vrot.lane.b32.xlu0 %v1480, 80
  %v1495 = vpop.permute.xlu0 %1494
  %1498 = vrot.lane.b32.xlu0 %v1484, 32
  %v1499 = vpop.permute.xlu0 %1498
  %1502 = vrot.lane.b32.xlu0 %v1488, 112
  %v1503 = vpop.permute.xlu0 %1502
  %1506 = vrot.lane.b32.xlu0 %v1492, 64
  %v1507 = vpop.permute.xlu0 %1506
  %v1509 = vsel %vm1067, %v1476, %v1495
  %v1510 = vsel %vm484, %v1495, %v1499
  %vm1511 = vcmask 916480
  %v1512 = vsel %vm1511, %v1510, %v1503
  %v1513 = vsel %vm501, %v1503, %v1507
  %v1514 = vpack.c.bf16 %v1509, %v1509
  %v1515 = vpack.c.bf16 %v1512, %v1512
  %v1516 = vpack.c.bf16 %v1513, %v1513
  %v1517 = vpack.c.bf16 %v1507, %v1507
  %v1518 = vld [vmem:[%s5] sm:$0xf]
  %v1519 = vld [vmem:[%s5 + $0x4] sm:$0xf]
  %v1520 = vld [vmem:[%s5 + $0x8] sm:$0xf]
  %v1521 = vld [vmem:[%s5 + $0xc] sm:$0xf]
  %v1522 = vld [vmem:[%s5 + $0x10] sm:$0xf]
  %v1523 = vld [vmem:[%s5 + $0x14] sm:$0xf]
  %v1524 = vld [vmem:[%s5 + $0x18] sm:$0xf]
  %v1525 = vld [vmem:[%s5 + $0x1c] sm:$0xf]
  %v1526 = vld [vmem:[%s5 + $0x20] sm:$0xf]
  %v1527 = vld [vmem:[%s5 + $0x24] sm:$0xf]
  %v1528 = vld [vmem:[%s5 + $0x28] sm:$0xf]
  %v1529 = vld [vmem:[%s5 + $0x2c] sm:$0xf]
  %v1530 = vld [vmem:[%s5 + $0x30] sm:$0xf]
  %v1531 = vld [vmem:[%s5 + $0x34] sm:$0xf]
  %v1532 = vld [vmem:[%s5 + $0x38] sm:$0xf]
  %v1533 = vld [vmem:[%s5 + $0x3c] sm:$0xf]
  %v1534 = vld [vmem:[%s5 + $0x40] sm:$0xf]
  %v1535 = vld [vmem:[%s5 + $0x44] sm:$0xf]
  %v1536 = vld [vmem:[%s5 + $0x48] sm:$0xf]
  %v1537 = vld [vmem:[%s5 + $0x4c] sm:$0xf]
  %v1538 = vld [vmem:[%s5 + $0x50] sm:$0xf]
  %v1539 = vld [vmem:[%s5 + $0x54] sm:$0xf]
  %v1540 = vld [vmem:[%s5 + $0x58] sm:$0xf]
  %v1541 = vld [vmem:[%s5 + $0x5c] sm:$0xf]
  %v1542 = vld [vmem:[%s5 + $0x60] sm:$0xf]
  %v1543 = vld [vmem:[%s5 + $0x64] sm:$0xf]
  %v1544 = vld [vmem:[%s5 + $0x68] sm:$0xf]
  %v1545 = vld [vmem:[%s5 + $0x6c] sm:$0xf]
  %v1546 = vld [vmem:[%s5 + $0x70] sm:$0xf]
  %v1547 = vld [vmem:[%s5 + $0x74] sm:$0xf]
  %v1548 = vld [vmem:[%s5 + $0x78] sm:$0xf]
  %v1549 = vld [vmem:[%s5 + $0x7c] sm:$0xf]
  %v1550 = vld [vmem:[%s5 + $0x80] sm:$0xf]
  %v1551 = vld [vmem:[%s5 + $0x84] sm:$0xf]
  %v1552 = vld [vmem:[%s5 + $0x88] sm:$0xf]
  %v1553 = vld [vmem:[%s5 + $0x8c] sm:$0xf]
  %v1554 = vld [vmem:[%s5 + $0x90] sm:$0xf]
  %v1555 = vld [vmem:[%s5 + $0x94] sm:$0xf]
  %v1556 = vld [vmem:[%s5 + $0x98] sm:$0xf]
  %v1557 = vld [vmem:[%s5 + $0x9c] sm:$0xf]
  %v1558 = vld [vmem:[%s5 + $0xa0] sm:$0xf]
  %v1559 = vld [vmem:[%s5 + $0xa4] sm:$0xf]
  %v1560 = vld [vmem:[%s5 + $0xa8] sm:$0xf]
  %v1561 = vld [vmem:[%s5 + $0xac] sm:$0xf]
  %v1562 = vld [vmem:[%s5 + $0xb0] sm:$0xf]
  %v1563 = vld [vmem:[%s5 + $0xb4] sm:$0xf]
  %v1564 = vld [vmem:[%s5 + $0xb8] sm:$0xf]
  %v1565 = vld [vmem:[%s5 + $0xbc] sm:$0xf]
  %v1566 = vld [vmem:[%s5 + $0xc0] sm:$0xf]
  %v1567 = vld [vmem:[%s5 + $0xc4] sm:$0xf]
  %v1568 = vld [vmem:[%s6] sm:$0x1]
  %v1570 = vlaneseq
  %v1571 = vshrl.u32 %v1570, 7
  %v1572 = vsub.s32 0, %v1571
  %v1573 = vrot.slane %v1568, %v1572
  %v1625 = vunpack.c.l.b16 %v1518
  %v1626 = vunpack.c.l.b16 %v1519
  %v1627 = vunpack.c.l.b16 %v1520
  %v1628 = vunpack.c.l.b16 %v1521
  %v1629 = vunpack.c.l.b16 %v1522
  %v1630 = vunpack.c.l.b16 %v1523
  %v1631 = vunpack.c.l.b16 %v1524
  %v1632 = vunpack.c.l.b16 %v1525
  %v1633 = vunpack.c.l.b16 %v1526
  %v1634 = vunpack.c.l.b16 %v1527
  %v1635 = vunpack.c.l.b16 %v1528
  %v1636 = vunpack.c.l.b16 %v1529
  %v1637 = vunpack.c.l.b16 %v1530
  %v1638 = vunpack.c.l.b16 %v1531
  %v1639 = vunpack.c.l.b16 %v1532
  %v1640 = vunpack.c.l.b16 %v1533
  %v1641 = vunpack.c.l.b16 %v1534
  %v1642 = vunpack.c.l.b16 %v1535
  %v1643 = vunpack.c.l.b16 %v1536
  %v1644 = vunpack.c.l.b16 %v1537
  %v1645 = vunpack.c.l.b16 %v1538
  %v1646 = vunpack.c.l.b16 %v1539
  %v1647 = vunpack.c.l.b16 %v1540
  %v1648 = vunpack.c.l.b16 %v1541
  %v1649 = vunpack.c.l.b16 %v1542
  %v1650 = vunpack.c.l.b16 %v1543
  %v1651 = vunpack.c.l.b16 %v1544
  %v1652 = vunpack.c.l.b16 %v1545
  %v1653 = vunpack.c.l.b16 %v1546
  %v1654 = vunpack.c.l.b16 %v1547
  %v1655 = vunpack.c.l.b16 %v1548
  %v1656 = vunpack.c.l.b16 %v1549
  %v1657 = vunpack.c.l.b16 %v1550
  %v1658 = vunpack.c.l.b16 %v1551
  %v1659 = vunpack.c.l.b16 %v1552
  %v1660 = vunpack.c.l.b16 %v1553
  %v1661 = vunpack.c.l.b16 %v1554
  %v1662 = vunpack.c.l.b16 %v1555
  %v1663 = vunpack.c.l.b16 %v1556
  %v1664 = vunpack.c.l.b16 %v1557
  %v1665 = vunpack.c.l.b16 %v1558
  %v1666 = vunpack.c.l.b16 %v1559
  %v1667 = vunpack.c.l.b16 %v1560
  %v1668 = vunpack.c.l.b16 %v1561
  %v1669 = vunpack.c.l.b16 %v1562
  %v1670 = vunpack.c.l.b16 %v1563
  %v1671 = vunpack.c.l.b16 %v1564
  %v1672 = vunpack.c.l.b16 %v1565
  %v1673 = vunpack.c.l.b16 %v1566
  %v1674 = vunpack.c.l.b16 %v1567
  %v1675 = vpack.c.b16 %v1626, %v1625
  %v1676 = vpack.c.b16 %v1628, %v1627
  %v1677 = vpack.c.b16 %v1630, %v1629
  %v1678 = vpack.c.b16 %v1632, %v1631
  %v1679 = vpack.c.b16 %v1634, %v1633
  %v1680 = vpack.c.b16 %v1636, %v1635
  %v1681 = vpack.c.b16 %v1638, %v1637
  %v1682 = vpack.c.b16 %v1640, %v1639
  %v1683 = vpack.c.b16 %v1642, %v1641
  %v1684 = vpack.c.b16 %v1644, %v1643
  %v1685 = vpack.c.b16 %v1646, %v1645
  %v1686 = vpack.c.b16 %v1648, %v1647
  %v1687 = vpack.c.b16 %v1650, %v1649
  %v1688 = vpack.c.b16 %v1652, %v1651
  %v1689 = vpack.c.b16 %v1654, %v1653
  %v1690 = vpack.c.b16 %v1656, %v1655
  %v1691 = vpack.c.b16 %v1658, %v1657
  %v1692 = vpack.c.b16 %v1660, %v1659
  %v1693 = vpack.c.b16 %v1662, %v1661
  %v1694 = vpack.c.b16 %v1664, %v1663
  %v1695 = vpack.c.b16 %v1666, %v1665
  %v1696 = vpack.c.b16 %v1668, %v1667
  %v1697 = vpack.c.b16 %v1670, %v1669
  %v1698 = vpack.c.b16 %v1672, %v1671
  %v1699 = vpack.c.b16 %v1674, %v1673
  %vm1725 = vcmask 130048
  %v1727 = vsel %vm1725, %v1517, 0
  %1729 = vmatprep.subr.bf16.mxu0 0
  %1730 = vmatpush1.bf16.msra.mxu0 %v1675
  %1731 = vmatprep.subr.bf16.mxu0 0
  %1732 = vmatpush1.bf16.msra.mxu0 %v1676
  %1733 = vmatprep.subr.bf16.mxu0 0
  %1734 = vmatpush1.bf16.msra.mxu0 %v1677
  %1735 = vmatprep.subr.bf16.mxu0 0
  %1736 = vmatpush1.bf16.msra.mxu0 %v1678
  %1737 = vmatprep.subr.bf16.mxu0 0
  %1738 = vmatpush1.bf16.msra.mxu0 %v1679
  %1739 = vmatprep.subr.bf16.mxu0 0
  %1740 = vmatpush1.bf16.msra.mxu0 %v1680
  %1741 = vmatprep.subr.bf16.mxu0 0
  %1742 = vmatpush1.bf16.msra.mxu0 %v1681
  %1743 = vmatprep.subr.bf16.mxu0 0
  %1744 = vmatpush1.bf16.msra.mxu0 %v1682
  %1745 = vmatprep.subr.bf16.mxu0 0
  %1746 = vmatpush1.bf16.msra.mxu0 %v1683
  %1747 = vmatprep.subr.bf16.mxu0 0
  %1748 = vmatpush1.bf16.msra.mxu0 %v1684
  %1749 = vmatprep.subr.bf16.mxu0 0
  %1750 = vmatpush1.bf16.msra.mxu0 %v1685
  %1751 = vmatprep.subr.bf16.mxu0 0
  %1752 = vmatpush1.bf16.msra.mxu0 %v1686
  %1753 = vmatprep.subr.bf16.mxu0 0
  %1754 = vmatpush1.bf16.msra.mxu0 %v1687
  %1755 = vmatprep.subr.bf16.mxu0 0
  %1756 = vmatpush1.bf16.msra.mxu0 %v1688
  %1757 = vmatprep.subr.bf16.mxu0 0
  %1758 = vmatpush1.bf16.msra.mxu0 %v1689
  %1759 = vmatprep.subr.bf16.mxu0 0
  %1760 = vmatpush1.bf16.msra.mxu0 %v1690
  %1761 = vmatprep.mubr.bf16.mxu0 %v1515
  %1762 = vmatmul.mubr.bf16.gmra.mrb[0].mxu0 %v1514
  %v1763 = vpop.f32.mrb[0].mxu0
  %v1764 = vadd.f32 %v1573, %v1763
  %v1765 = vpop.f32.mrb[0].mxu0
  %v1766 = vpop.f32.mrb[0].mxu0
  %v1767 = vpop.f32.mrb[0].mxu0
  %1768 = vdwg.mxu0
  %1769 = vmatprep.subr.bf16.mxu0 0
  %1770 = vmatpush1.bf16.msra.mxu0 %v1691
  %1771 = vmatprep.subr.bf16.mxu0 0
  %1772 = vmatpush1.bf16.msra.mxu0 %v1692
  %1773 = vmatprep.subr.bf16.mxu0 0
  %1774 = vmatpush1.bf16.msra.mxu0 %v1693
  %1775 = vmatprep.subr.bf16.mxu0 0
  %1776 = vmatpush1.bf16.msra.mxu0 %v1694
  %1777 = vmatprep.subr.bf16.mxu0 0
  %1778 = vmatpush1.bf16.msra.mxu0 %v1695
  %1779 = vmatprep.subr.bf16.mxu0 0
  %1780 = vmatpush1.bf16.msra.mxu0 %v1696
  %1781 = vmatprep.subr.bf16.mxu0 0
  %1782 = vmatpush1.bf16.msra.mxu0 %v1697
  %1783 = vmatprep.subr.bf16.mxu0 0
  %1784 = vmatpush1.bf16.msra.mxu0 %v1698
  %1785 = vmatprep.subr.bf16.mxu0 0
  %1786 = vmatpush1.bf16.msra.mxu0 %v1699
  %1787 = vmatprep.subr.bf16.mxu0 0
  %1788 = vmatpush1.bf16.msra.mxu0 0
  %1789 = vmatprep.subr.bf16.mxu0 0
  %1790 = vmatpush1.bf16.msra.mxu0 0
  %1791 = vmatprep.subr.bf16.mxu0 0
  %1792 = vmatpush1.bf16.msra.mxu0 0
  %1793 = vmatprep.subr.bf16.mxu0 0
  %1794 = vmatpush1.bf16.msra.mxu0 0
  %1795 = vmatprep.subr.bf16.mxu0 0
  %1796 = vmatpush1.bf16.msra.mxu0 0
  %1797 = vmatprep.subr.bf16.mxu0 0
  %1798 = vmatpush1.bf16.msra.mxu0 0
  %1799 = vmatprep.subr.bf16.mxu0 0
  %1800 = vmatpush1.bf16.msra.mxu0 0
  %1801 = vmatprep.mubr.bf16.mxu0 %v1727
  %1802 = vmatmul.mubr.bf16.gmra.mrb[0].mxu0 %v1516
  %v1803 = vpop.f32.mrb[0].mxu0
  %v1804 = vadd.f32 %v1764, %v1803
  %v1805 = vpop.f32.mrb[0].mxu0
  %v1806 = vpop.f32.mrb[0].mxu0
  %v1807 = vpop.f32.mrb[0].mxu0
  %1808 = vdwg.mxu0
  %1809 = vst [vmem:[%s7] sm:$0xff] %v1804
  // Predicated region
  $region30: #{lenet_forward.1} parent=0 // pred_check
    _
  $region31: #{lenet_forward.1} parent=0 // pred_check_branch
    %1811 = sbr.rel (0) target = $region33
  $region32: #{lenet_forward.1} parent=0 // pred_region
    _
  $region33: #{lenet_forward.1} parent=0 // pred_fallthru
    _
  // Predicated region
  $region34: #{lenet_forward.1} parent=0 // pred_check
    _
  $region35: #{lenet_forward.1} parent=0 // pred_check_branch
    %1813 = sbr.rel (0) target = $region37
  $region36: #{lenet_forward.1} parent=0 // pred_region
    _
  $region37: #{lenet_forward.1} parent=0 // pred_fallthru
    _

</llo_original>
